<compile_context>
chip_gen: v6e
topology: v6e:2x2x1
jax: 0.10.0
libtpu: 0.0.40
codegen_flags: <defaults>
</compile_context>

<pallas_src>
import jax
import jax.numpy as jnp
from jax.experimental import pallas as pl
from jax.experimental.pallas import tpu as pltpu

# ---- problem sizes (small, consistent with the module) ----
B, L, D = 2, 16, 32          # batch, q_len (patch count), d_model
H = 4                        # n_heads
DK = D // H                  # d_k
DV = D // H                  # d_v
DFF = 64                     # d_ff
EPS = 1e-5
SCALE = float(DK) ** -0.5    # non-learnable since lsa=False
BL = B * L
INV_N = 1.0 / BL
MXU_DT = jnp.bfloat16        # MXU operand dtype (f32 accumulation everywhere)

# weight-slab row offsets (one lane-dense bf16 slab, 128 lanes wide)
ROW_QKV = 0                  # rows [0, D)        cols [0, 3D)   : [Wq*s | Wk | Wv]
ROW_WO = D                   # rows [D, 2D)       cols [0, D)    : W_O
ROW_W1 = 2 * D               # rows [2D, 3D)      cols [0, DFF)  : W1
ROW_W2 = 3 * D               # rows [3D, 3D+DFF)  cols [0, D)    : W2
W_ROWS = 3 * D + DFF         # 160


def _erf(x):
    # Abramowitz & Stegun 7.1.26 polynomial (|err| < 1.5e-7).  Exact EUP
    # reciprocal kept here so GELU matches torch's erf form to ~1e-6.
    a1, a2, a3, a4, a5 = 0.254829592, -0.284496736, 1.421413741, -1.453152027, 1.061405429
    p = 0.3275911
    ax = jnp.abs(x)
    t = pl.reciprocal(1.0 + p * ax)
    poly = ((((a5 * t + a4) * t + a3) * t + a2) * t + a1) * t
    y = 1.0 - poly * jnp.exp(-ax * ax)
    return jnp.where(x < 0.0, -y, y)


def _gelu(x):
    # exact GELU (erf form) == torch.nn.GELU() default
    # TODO(synk): tanh-approx GELU would halve the EUP pushes if the tolerance
    # budget ever allows ~1e-3 deviation from torch.
    return 0.5 * x * (1.0 + _erf(x * (2.0 ** -0.5)))


def _batchnorm(x, gamma, beta):
    # Transpose(1,2) -> BatchNorm1d(d_model) -> Transpose(1,2), training-mode
    # batch stats.  Centered two-pass variance (numerically safe), biased.
    mean = jnp.sum(x, axis=0, keepdims=True) * INV_N
    xc = x - mean
    var = jnp.sum(xc * xc, axis=0, keepdims=True) * INV_N
    inv = jax.lax.rsqrt(var + EPS)
    return xc * (inv * gamma) + beta


def encoder_layer_kernel(x_ref, w_ref, vec_ref, out_ref):
    x = x_ref[...]                                   # (BL, D) f32

    # weight slab slices (bf16), every sub-weight starts at lane 0 / 8-row mult
    w_qkv = w_ref[ROW_QKV:ROW_QKV + D, 0:3 * D]      # (D, 3D), scale folded in Wq
    w_o = w_ref[ROW_WO:ROW_WO + D, 0:D]              # (D, D)
    w_1 = w_ref[ROW_W1:ROW_W1 + D, 0:DFF]            # (D, DFF)
    w_2 = w_ref[ROW_W2:ROW_W2 + DFF, 0:D]            # (DFF, D)

    vec = vec_ref[...]                               # (8, 128) f32 bias/affine slab
    b_qkv = vec[0:1, 0:3 * D]                        # [bq*scale | bk | bv]
    bo = vec[1:2, 0:D]
    g1 = vec[2:3, 0:D]
    be1 = vec[3:4, 0:D]
    bf1 = vec[4:5, 0:DFF]
    bf2 = vec[5:6, 0:D]
    g2 = vec[6:7, 0:D]
    be2 = vec[7:8, 0:D]

    # ---- fused QKV projection: one MXU matmul, bf16 operands, f32 accum ----
    qkv = jnp.dot(x.astype(MXU_DT), w_qkv,
                  preferred_element_type=jnp.float32) + b_qkv       # (BL, 3D)

    # head-structured views: (B, L, D) with heads packed along the lane axis
    q3 = qkv[:, 0:D].reshape(B, L, D).astype(MXU_DT)       # already scaled
    k3 = qkv[:, D:2 * D].reshape(B, L, D).astype(MXU_DT)
    v3 = qkv[:, 2 * D:3 * D].reshape(B, L, D).astype(MXU_DT)

    # ---- scaled dot-product attention ----
    # Per-head score matmuls (batched over B), then all heads concatenated
    # along the leading axis so the softmax max/exp/sum/reciprocal each run
    # exactly once over the fused (H*B, L, L) buffer.
    scores = jnp.concatenate(
        [jnp.einsum('bqd,bkd->bqk',
                    q3[:, :, h * DK:(h + 1) * DK],
                    k3[:, :, h * DK:(h + 1) * DK],
                    preferred_element_type=jnp.float32)
         for h in range(H)],
        axis=0)                                            # (H*B, L, L) f32
    scores = scores - jnp.max(scores, axis=-1, keepdims=True)
    e = jnp.exp(scores)
    attn = e * pl.reciprocal(jnp.sum(e, axis=-1, keepdims=True), approx=True)
    attn = attn.astype(MXU_DT)

    # Per-head context, lane-concatenated back to (B, L, D) so the output
    # projection is a single (BL, D) @ (D, D) MXU matmul.
    ctx = jnp.concatenate(
        [jnp.einsum('bqk,bkv->bqv',
                    attn[h * B:(h + 1) * B],
                    v3[:, :, h * DV:(h + 1) * DV],
                    preferred_element_type=jnp.float32)
         for h in range(H)],
        axis=-1)                                           # (B, L, D) f32
    proj = jnp.dot(ctx.reshape(BL, D).astype(MXU_DT), w_o,
                   preferred_element_type=jnp.float32)     # (BL, D)

    # ---- output-projection bias + residual + BatchNorm (dropout = identity) ----
    src = x + proj + bo
    src = _batchnorm(src, g1, be1)

    # ---- position-wise FFN + residual + BatchNorm ----
    h1 = jnp.dot(src.astype(MXU_DT), w_1,
                 preferred_element_type=jnp.float32) + bf1
    h1 = _gelu(h1)
    ff = jnp.dot(h1.astype(MXU_DT), w_2,
                 preferred_element_type=jnp.float32) + bf2
    out = _batchnorm(src + ff, g2, be2)

    out_ref[...] = out.astype(out_ref.dtype)


def init_params(key):
    ks = jax.random.split(key, 12)
    n = lambda k, shape, s: jax.random.normal(k, shape, jnp.float32) * s
    return {
        "wq": n(ks[0], (D, H * DK), 0.1), "bq": n(ks[1], (H * DK,), 0.02),
        "wk": n(ks[2], (D, H * DK), 0.1), "bk": n(ks[3], (H * DK,), 0.02),
        "wv": n(ks[4], (D, H * DV), 0.1), "bv": n(ks[5], (H * DV,), 0.02),
        "wo": n(ks[6], (H * DV, D), 0.1), "bo": n(ks[7], (D,), 0.02),
        "g1": jnp.ones((D,), jnp.float32), "be1": jnp.zeros((D,), jnp.float32),
        "w1": n(ks[8], (D, DFF), 0.1), "bf1": n(ks[9], (DFF,), 0.02),
        "w2": n(ks[10], (DFF, D), 0.1), "bf2": n(ks[11], (D,), 0.02),
        "g2": jnp.ones((D,), jnp.float32), "be2": jnp.zeros((D,), jnp.float32),
    }


def pack_params(p):
    """Pack the 16 parameter tensors into 2 slabs (done once, host side)."""
    # Fold the non-learnable attention scale into W_Q / b_Q.
    wq = p["wq"] * SCALE
    bq = p["bq"] * SCALE
    # Slab 1: one lane-dense bf16 weight slab (W_ROWS, 128).
    w = jnp.zeros((W_ROWS, 128), jnp.float32)
    w = w.at[ROW_QKV:ROW_QKV + D, 0:3 * D].set(
        jnp.concatenate([wq, p["wk"], p["wv"]], axis=1))
    w = w.at[ROW_WO:ROW_WO + D, 0:D].set(p["wo"])
    w = w.at[ROW_W1:ROW_W1 + D, 0:DFF].set(p["w1"])
    w = w.at[ROW_W2:ROW_W2 + DFF, 0:D].set(p["w2"])
    w = w.astype(MXU_DT)
    # Slab 2: all biases / BatchNorm affine params in one (8, 128) f32 tile.
    vec = jnp.zeros((8, 128), jnp.float32)
    vec = vec.at[0, 0:3 * D].set(jnp.concatenate([bq, p["bk"], p["bv"]]))
    vec = vec.at[1, 0:D].set(p["bo"])
    vec = vec.at[2, 0:D].set(p["g1"])
    vec = vec.at[3, 0:D].set(p["be1"])
    vec = vec.at[4, 0:DFF].set(p["bf1"])
    vec = vec.at[5, 0:D].set(p["bf2"])
    vec = vec.at[6, 0:D].set(p["g2"])
    vec = vec.at[7, 0:D].set(p["be2"])
    return w, vec


def reference_forward(src, p):
    """Pure-JAX f32 reference mirroring the PyTorch module (training-mode BN)."""
    def bn(x, g, b):
        mean = jnp.mean(x, axis=0, keepdims=True)
        var = jnp.mean((x - mean) ** 2, axis=0, keepdims=True)
        return (x - mean) / jnp.sqrt(var + EPS) * g + b

    x = src.reshape(BL, D)
    q = (x @ p["wq"] + p["bq"]).reshape(B, L, H, DK).transpose(0, 2, 1, 3)
    k = (x @ p["wk"] + p["bk"]).reshape(B, L, H, DK).transpose(0, 2, 1, 3)
    v = (x @ p["wv"] + p["bv"]).reshape(B, L, H, DV).transpose(0, 2, 1, 3)
    s = jnp.einsum('bhqd,bhkd->bhqk', q, k) * SCALE
    a = jax.nn.softmax(s, axis=-1)
    ctx = jnp.einsum('bhqk,bhkd->bhqd', a, v)
    ctx = ctx.transpose(0, 2, 1, 3).reshape(BL, D)
    y = x + (ctx @ p["wo"] + p["bo"])
    y = bn(y, p["g1"], p["be1"])
    h1 = y @ p["w1"] + p["bf1"]
    h1 = 0.5 * h1 * (1.0 + jax.lax.erf(h1 / jnp.sqrt(2.0)))
    z = y + (h1 @ p["w2"] + p["bf2"])
    z = bn(z, p["g2"], p["be2"])
    return z.reshape(B, L, D)


@jax.jit
def tst_encoder_layer(src, wslab, vec):
    b, l, d = src.shape
    x2d = src.reshape(b * l, d)                          # glue reshape
    out2d = pl.pallas_call(
        encoder_layer_kernel,
        out_shape=jax.ShapeDtypeStruct((b * l, d), src.dtype),
        grid=(1,),
        in_specs=[
            pl.BlockSpec((b * l, d), lambda i: (0, 0)),
            pl.BlockSpec(wslab.shape, lambda i: (0, 0)),
            pl.BlockSpec(vec.shape, lambda i: (0, 0)),
        ],
        out_specs=pl.BlockSpec((b * l, d), lambda i: (0, 0)),
        compiler_params=pltpu.CompilerParams(
            dimension_semantics=("arbitrary",)),
    )(x2d, wslab, vec)
    return out2d.reshape(b, l, d)


if __name__ == "__main__":
    key = jax.random.PRNGKey(0)
    k_src, k_par = jax.random.split(key)
    src = jax.random.normal(k_src, (B, L, D), dtype=jnp.float32)
    params = init_params(k_par)
    wslab, vec = pack_params(params)

    out = tst_encoder_layer(src, wslab, vec)
    jax.block_until_ready(out)

    assert out.shape == (B, L, D), out.shape
    assert bool(jnp.all(jnp.isfinite(out)))

    # f32 reference check (bf16 MXU operands -> not bit-identical; tolerance).
    ref = reference_forward(src, params)
    err = float(jnp.max(jnp.abs(out - ref)))
    assert err < 1e-1, f"max abs diff vs f32 reference = {err}"

    print("KERNEL_OK")
</pallas_src>

<mosaic_0001>
module attributes {stable_mosaic.version = 11 : i64} {
  func.func @encoder_layer_kernel(%arg0: i32, %arg1: memref<32x32xf32, #tpu.memory_space<vmem>>, %arg2: memref<160x128xbf16, #tpu.memory_space<vmem>>, %arg3: memref<8x128xf32, #tpu.memory_space<vmem>>, %arg4: memref<32x32xf32, #tpu.memory_space<vmem>>) attributes {dimension_semantics = [#tpu.dimension_semantics<arbitrary>], iteration_bounds = array<i64: 1>, scalar_prefetch = 0 : i64, scratch_operands = 0 : i64, tpu.core_type = #tpu.core_type<tc>, window_params = [{pipeline_mode = #tpu.pipeline_mode<synchronous>, transform_indices = @transform_0, window_bounds = array<i64: 32, 32>}, {pipeline_mode = #tpu.pipeline_mode<synchronous>, transform_indices = @transform_1, window_bounds = array<i64: 160, 128>}, {pipeline_mode = #tpu.pipeline_mode<synchronous>, transform_indices = @transform_2, window_bounds = array<i64: 8, 128>}, {pipeline_mode = #tpu.pipeline_mode<synchronous>, transform_indices = @transform_3, window_bounds = array<i64: 32, 32>}]} {
    %c0 = arith.constant 0 : index
    %c0_0 = arith.constant 0 : index
    %0 = vector.load %arg1[%c0, %c0_0] : memref<32x32xf32, #tpu.memory_space<vmem>>, vector<32x32xf32>
    %c0_1 = arith.constant 0 : index
    %c0_2 = arith.constant 0 : index
    %1 = vector.load %arg2[%c0_1, %c0_2] : memref<160x128xbf16, #tpu.memory_space<vmem>>, vector<32x96xbf16>
    %c32 = arith.constant 32 : index
    %c0_3 = arith.constant 0 : index
    %2 = vector.load %arg2[%c32, %c0_3] : memref<160x128xbf16, #tpu.memory_space<vmem>>, vector<32x32xbf16>
    %c64 = arith.constant 64 : index
    %c0_4 = arith.constant 0 : index
    %3 = vector.load %arg2[%c64, %c0_4] : memref<160x128xbf16, #tpu.memory_space<vmem>>, vector<32x64xbf16>
    %c96 = arith.constant 96 : index
    %c0_5 = arith.constant 0 : index
    %4 = vector.load %arg2[%c96, %c0_5] : memref<160x128xbf16, #tpu.memory_space<vmem>>, vector<64x32xbf16>
    %c0_6 = arith.constant 0 : index
    %c0_7 = arith.constant 0 : index
    %5 = vector.load %arg3[%c0_6, %c0_7] : memref<8x128xf32, #tpu.memory_space<vmem>>, vector<8x128xf32>
    %6 = vector.extract_strided_slice %5 {offsets = [0, 0], sizes = [1, 96], strides = [1, 1]} : vector<8x128xf32> to vector<1x96xf32>
    %7 = vector.extract_strided_slice %5 {offsets = [1, 0], sizes = [1, 32], strides = [1, 1]} : vector<8x128xf32> to vector<1x32xf32>
    %8 = vector.extract_strided_slice %5 {offsets = [2, 0], sizes = [1, 32], strides = [1, 1]} : vector<8x128xf32> to vector<1x32xf32>
    %9 = vector.extract_strided_slice %5 {offsets = [3, 0], sizes = [1, 32], strides = [1, 1]} : vector<8x128xf32> to vector<1x32xf32>
    %10 = vector.extract_strided_slice %5 {offsets = [4, 0], sizes = [1, 64], strides = [1, 1]} : vector<8x128xf32> to vector<1x64xf32>
    %11 = vector.extract_strided_slice %5 {offsets = [5, 0], sizes = [1, 32], strides = [1, 1]} : vector<8x128xf32> to vector<1x32xf32>
    %12 = vector.extract_strided_slice %5 {offsets = [6, 0], sizes = [1, 32], strides = [1, 1]} : vector<8x128xf32> to vector<1x32xf32>
    %13 = vector.extract_strided_slice %5 {offsets = [7, 0], sizes = [1, 32], strides = [1, 1]} : vector<8x128xf32> to vector<1x32xf32>
    %14 = arith.truncf %0 : vector<32x32xf32> to vector<32x32xbf16>
    %cst = arith.constant dense<0.000000e+00> : vector<32x96xf32>
    %15 = tpu.matmul %14, %1, %cst {dimension_numbers = #tpu.dot_dimension_numbers<[1], [0], [0], [1], [0, 0, 1, 1], [], []>} : vector<32x32xbf16>, vector<32x96xbf16>, vector<32x96xf32> -> vector<32x96xf32>
    %16 = vector.broadcast %6 : vector<1x96xf32> to vector<32x96xf32>
    %17 = arith.addf %15, %16 : vector<32x96xf32>
    %18 = vector.extract_strided_slice %17 {offsets = [0, 0], sizes = [32, 32], strides = [1, 1]} : vector<32x96xf32> to vector<32x32xf32>
    %19 = vector.shape_cast %18 : vector<32x32xf32> to vector<2x16x32xf32>
    %20 = arith.truncf %19 : vector<2x16x32xf32> to vector<2x16x32xbf16>
    %21 = vector.extract_strided_slice %17 {offsets = [0, 32], sizes = [32, 32], strides = [1, 1]} : vector<32x96xf32> to vector<32x32xf32>
    %22 = vector.shape_cast %21 : vector<32x32xf32> to vector<2x16x32xf32>
    %23 = arith.truncf %22 : vector<2x16x32xf32> to vector<2x16x32xbf16>
    %24 = vector.extract_strided_slice %17 {offsets = [0, 64], sizes = [32, 32], strides = [1, 1]} : vector<32x96xf32> to vector<32x32xf32>
    %25 = vector.shape_cast %24 : vector<32x32xf32> to vector<2x16x32xf32>
    %26 = arith.truncf %25 : vector<2x16x32xf32> to vector<2x16x32xbf16>
    %27 = vector.extract_strided_slice %20 {offsets = [0, 0, 0], sizes = [2, 16, 8], strides = [1, 1, 1]} : vector<2x16x32xbf16> to vector<2x16x8xbf16>
    %28 = vector.extract_strided_slice %23 {offsets = [0, 0, 0], sizes = [2, 16, 8], strides = [1, 1, 1]} : vector<2x16x32xbf16> to vector<2x16x8xbf16>
    "tpu.trace_start"() <{level = 10 : i32, message = "bqd,bkd->bqk"}> : () -> ()
    %cst_8 = arith.constant dense<0.000000e+00> : vector<2x16x16xf32>
    %29 = tpu.matmul %27, %28, %cst_8 {dimension_numbers = #tpu.dot_dimension_numbers<[2], [2], [1], [1], [0, 0, 0, 1, 1, 1], [0], [0]>} : vector<2x16x8xbf16>, vector<2x16x8xbf16>, vector<2x16x16xf32> -> vector<2x16x16xf32>
    "tpu.trace_stop"() : () -> ()
    %30 = vector.extract_strided_slice %20 {offsets = [0, 0, 8], sizes = [2, 16, 8], strides = [1, 1, 1]} : vector<2x16x32xbf16> to vector<2x16x8xbf16>
    %31 = vector.extract_strided_slice %23 {offsets = [0, 0, 8], sizes = [2, 16, 8], strides = [1, 1, 1]} : vector<2x16x32xbf16> to vector<2x16x8xbf16>
    "tpu.trace_start"() <{level = 10 : i32, message = "bqd,bkd->bqk"}> : () -> ()
    %cst_9 = arith.constant dense<0.000000e+00> : vector<2x16x16xf32>
    %32 = tpu.matmul %30, %31, %cst_9 {dimension_numbers = #tpu.dot_dimension_numbers<[2], [2], [1], [1], [0, 0, 0, 1, 1, 1], [0], [0]>} : vector<2x16x8xbf16>, vector<2x16x8xbf16>, vector<2x16x16xf32> -> vector<2x16x16xf32>
    "tpu.trace_stop"() : () -> ()
    %33 = vector.extract_strided_slice %20 {offsets = [0, 0, 16], sizes = [2, 16, 8], strides = [1, 1, 1]} : vector<2x16x32xbf16> to vector<2x16x8xbf16>
    %34 = vector.extract_strided_slice %23 {offsets = [0, 0, 16], sizes = [2, 16, 8], strides = [1, 1, 1]} : vector<2x16x32xbf16> to vector<2x16x8xbf16>
    "tpu.trace_start"() <{level = 10 : i32, message = "bqd,bkd->bqk"}> : () -> ()
    %cst_10 = arith.constant dense<0.000000e+00> : vector<2x16x16xf32>
    %35 = tpu.matmul %33, %34, %cst_10 {dimension_numbers = #tpu.dot_dimension_numbers<[2], [2], [1], [1], [0, 0, 0, 1, 1, 1], [0], [0]>} : vector<2x16x8xbf16>, vector<2x16x8xbf16>, vector<2x16x16xf32> -> vector<2x16x16xf32>
    "tpu.trace_stop"() : () -> ()
    %36 = vector.extract_strided_slice %20 {offsets = [0, 0, 24], sizes = [2, 16, 8], strides = [1, 1, 1]} : vector<2x16x32xbf16> to vector<2x16x8xbf16>
    %37 = vector.extract_strided_slice %23 {offsets = [0, 0, 24], sizes = [2, 16, 8], strides = [1, 1, 1]} : vector<2x16x32xbf16> to vector<2x16x8xbf16>
    "tpu.trace_start"() <{level = 10 : i32, message = "bqd,bkd->bqk"}> : () -> ()
    %cst_11 = arith.constant dense<0.000000e+00> : vector<2x16x16xf32>
    %38 = tpu.matmul %36, %37, %cst_11 {dimension_numbers = #tpu.dot_dimension_numbers<[2], [2], [1], [1], [0, 0, 0, 1, 1, 1], [0], [0]>} : vector<2x16x8xbf16>, vector<2x16x8xbf16>, vector<2x16x16xf32> -> vector<2x16x16xf32>
    "tpu.trace_stop"() : () -> ()
    %39 = tpu.concatenate %29, %32, %35, %38 in 0 : vector<2x16x16xf32>, vector<2x16x16xf32>, vector<2x16x16xf32>, vector<2x16x16xf32> -> vector<8x16x16xf32>
    %cst_12 = arith.constant dense<0xFF800000> : vector<8x16xf32>
    %40 = vector.multi_reduction <maximumf>, %39, %cst_12 [2] : vector<8x16x16xf32> to vector<8x16xf32>
    %41 = vector.shape_cast %40 : vector<8x16xf32> to vector<8x16x1xf32>
    %42 = vector.broadcast %41 : vector<8x16x1xf32> to vector<8x16x16xf32>
    %43 = arith.subf %39, %42 : vector<8x16x16xf32>
    %44 = math.exp %43 : vector<8x16x16xf32>
    %cst_13 = arith.constant dense<0.000000e+00> : vector<8x16xf32>
    %45 = vector.multi_reduction <add>, %44, %cst_13 [2] : vector<8x16x16xf32> to vector<8x16xf32>
    %46 = vector.shape_cast %45 : vector<8x16xf32> to vector<8x16x1xf32>
    %47 = tpu.reciprocal %46 {approx = true} : vector<8x16x1xf32> -> vector<8x16x1xf32>
    %48 = vector.broadcast %47 : vector<8x16x1xf32> to vector<8x16x16xf32>
    %49 = arith.mulf %44, %48 : vector<8x16x16xf32>
    %50 = arith.truncf %49 : vector<8x16x16xf32> to vector<8x16x16xbf16>
    %51 = vector.extract_strided_slice %50 {offsets = [0, 0, 0], sizes = [2, 16, 16], strides = [1, 1, 1]} : vector<8x16x16xbf16> to vector<2x16x16xbf16>
    %52 = vector.extract_strided_slice %26 {offsets = [0, 0, 0], sizes = [2, 16, 8], strides = [1, 1, 1]} : vector<2x16x32xbf16> to vector<2x16x8xbf16>
    "tpu.trace_start"() <{level = 10 : i32, message = "bqk,bkv->bqv"}> : () -> ()
    %cst_14 = arith.constant dense<0.000000e+00> : vector<2x16x8xf32>
    %53 = tpu.matmul %51, %52, %cst_14 {dimension_numbers = #tpu.dot_dimension_numbers<[2], [1], [1], [2], [0, 0, 0, 1, 1, 2], [0], [0]>} : vector<2x16x16xbf16>, vector<2x16x8xbf16>, vector<2x16x8xf32> -> vector<2x16x8xf32>
    "tpu.trace_stop"() : () -> ()
    %54 = vector.extract_strided_slice %50 {offsets = [2, 0, 0], sizes = [2, 16, 16], strides = [1, 1, 1]} : vector<8x16x16xbf16> to vector<2x16x16xbf16>
    %55 = vector.extract_strided_slice %26 {offsets = [0, 0, 8], sizes = [2, 16, 8], strides = [1, 1, 1]} : vector<2x16x32xbf16> to vector<2x16x8xbf16>
    "tpu.trace_start"() <{level = 10 : i32, message = "bqk,bkv->bqv"}> : () -> ()
    %cst_15 = arith.constant dense<0.000000e+00> : vector<2x16x8xf32>
    %56 = tpu.matmul %54, %55, %cst_15 {dimension_numbers = #tpu.dot_dimension_numbers<[2], [1], [1], [2], [0, 0, 0, 1, 1, 2], [0], [0]>} : vector<2x16x16xbf16>, vector<2x16x8xbf16>, vector<2x16x8xf32> -> vector<2x16x8xf32>
    "tpu.trace_stop"() : () -> ()
    %57 = vector.extract_strided_slice %50 {offsets = [4, 0, 0], sizes = [2, 16, 16], strides = [1, 1, 1]} : vector<8x16x16xbf16> to vector<2x16x16xbf16>
    %58 = vector.extract_strided_slice %26 {offsets = [0, 0, 16], sizes = [2, 16, 8], strides = [1, 1, 1]} : vector<2x16x32xbf16> to vector<2x16x8xbf16>
    "tpu.trace_start"() <{level = 10 : i32, message = "bqk,bkv->bqv"}> : () -> ()
    %cst_16 = arith.constant dense<0.000000e+00> : vector<2x16x8xf32>
    %59 = tpu.matmul %57, %58, %cst_16 {dimension_numbers = #tpu.dot_dimension_numbers<[2], [1], [1], [2], [0, 0, 0, 1, 1, 2], [0], [0]>} : vector<2x16x16xbf16>, vector<2x16x8xbf16>, vector<2x16x8xf32> -> vector<2x16x8xf32>
    "tpu.trace_stop"() : () -> ()
    %60 = vector.extract_strided_slice %50 {offsets = [6, 0, 0], sizes = [2, 16, 16], strides = [1, 1, 1]} : vector<8x16x16xbf16> to vector<2x16x16xbf16>
    %61 = vector.extract_strided_slice %26 {offsets = [0, 0, 24], sizes = [2, 16, 8], strides = [1, 1, 1]} : vector<2x16x32xbf16> to vector<2x16x8xbf16>
    "tpu.trace_start"() <{level = 10 : i32, message = "bqk,bkv->bqv"}> : () -> ()
    %cst_17 = arith.constant dense<0.000000e+00> : vector<2x16x8xf32>
    %62 = tpu.matmul %60, %61, %cst_17 {dimension_numbers = #tpu.dot_dimension_numbers<[2], [1], [1], [2], [0, 0, 0, 1, 1, 2], [0], [0]>} : vector<2x16x16xbf16>, vector<2x16x8xbf16>, vector<2x16x8xf32> -> vector<2x16x8xf32>
    "tpu.trace_stop"() : () -> ()
    %63 = tpu.concatenate %53, %56, %59, %62 in 2 : vector<2x16x8xf32>, vector<2x16x8xf32>, vector<2x16x8xf32>, vector<2x16x8xf32> -> vector<2x16x32xf32>
    %64 = vector.shape_cast %63 : vector<2x16x32xf32> to vector<32x32xf32>
    %65 = arith.truncf %64 : vector<32x32xf32> to vector<32x32xbf16>
    %cst_18 = arith.constant dense<0.000000e+00> : vector<32x32xf32>
    %66 = tpu.matmul %65, %2, %cst_18 {dimension_numbers = #tpu.dot_dimension_numbers<[1], [0], [0], [1], [0, 0, 1, 1], [], []>} : vector<32x32xbf16>, vector<32x32xbf16>, vector<32x32xf32> -> vector<32x32xf32>
    %67 = arith.addf %0, %66 : vector<32x32xf32>
    %68 = vector.broadcast %7 : vector<1x32xf32> to vector<32x32xf32>
    %69 = arith.addf %67, %68 : vector<32x32xf32>
    %cst_19 = arith.constant dense<0.000000e+00> : vector<32xf32>
    %70 = vector.multi_reduction <add>, %69, %cst_19 [0] : vector<32x32xf32> to vector<32xf32>
    %71 = vector.shape_cast %70 : vector<32xf32> to vector<1x32xf32>
    %cst_20 = arith.constant 3.125000e-02 : f32
    %72 = vector.broadcast %cst_20 : f32 to vector<1x32xf32>
    %73 = arith.mulf %71, %72 : vector<1x32xf32>
    %74 = vector.broadcast %73 : vector<1x32xf32> to vector<32x32xf32>
    %75 = arith.subf %69, %74 : vector<32x32xf32>
    %76 = arith.mulf %75, %75 : vector<32x32xf32>
    %cst_21 = arith.constant dense<0.000000e+00> : vector<32xf32>
    %77 = vector.multi_reduction <add>, %76, %cst_21 [0] : vector<32x32xf32> to vector<32xf32>
    %78 = vector.shape_cast %77 : vector<32xf32> to vector<1x32xf32>
    %cst_22 = arith.constant 3.125000e-02 : f32
    %79 = vector.broadcast %cst_22 : f32 to vector<1x32xf32>
    %80 = arith.mulf %78, %79 : vector<1x32xf32>
    %cst_23 = arith.constant 9.99999974E-6 : f32
    %81 = vector.broadcast %cst_23 : f32 to vector<1x32xf32>
    %82 = arith.addf %80, %81 : vector<1x32xf32>
    %83 = math.rsqrt %82 : vector<1x32xf32>
    %84 = arith.mulf %83, %8 : vector<1x32xf32>
    %85 = vector.broadcast %84 : vector<1x32xf32> to vector<32x32xf32>
    %86 = arith.mulf %75, %85 : vector<32x32xf32>
    %87 = vector.broadcast %9 : vector<1x32xf32> to vector<32x32xf32>
    %88 = arith.addf %86, %87 : vector<32x32xf32>
    %89 = arith.truncf %88 : vector<32x32xf32> to vector<32x32xbf16>
    %cst_24 = arith.constant dense<0.000000e+00> : vector<32x64xf32>
    %90 = tpu.matmul %89, %3, %cst_24 {dimension_numbers = #tpu.dot_dimension_numbers<[1], [0], [0], [1], [0, 0, 1, 1], [], []>} : vector<32x32xbf16>, vector<32x64xbf16>, vector<32x64xf32> -> vector<32x64xf32>
    %91 = vector.broadcast %10 : vector<1x64xf32> to vector<32x64xf32>
    %92 = arith.addf %90, %91 : vector<32x64xf32>
    %cst_25 = arith.constant 5.000000e-01 : f32
    %93 = vector.broadcast %cst_25 : f32 to vector<32x64xf32>
    %94 = arith.mulf %93, %92 : vector<32x64xf32>
    %cst_26 = arith.constant 0.707106769 : f32
    %95 = vector.broadcast %cst_26 : f32 to vector<32x64xf32>
    %96 = arith.mulf %92, %95 : vector<32x64xf32>
    %97 = math.absf %96 : vector<32x64xf32>
    %cst_27 = arith.constant 0.327591091 : f32
    %98 = vector.broadcast %cst_27 : f32 to vector<32x64xf32>
    %99 = arith.mulf %98, %97 : vector<32x64xf32>
    %cst_28 = arith.constant 1.000000e+00 : f32
    %100 = vector.broadcast %cst_28 : f32 to vector<32x64xf32>
    %101 = arith.addf %100, %99 : vector<32x64xf32>
    %102 = tpu.reciprocal %101 : vector<32x64xf32> -> vector<32x64xf32>
    %cst_29 = arith.constant 1.06140542 : f32
    %103 = vector.broadcast %cst_29 : f32 to vector<32x64xf32>
    %104 = arith.mulf %103, %102 : vector<32x64xf32>
    %cst_30 = arith.constant -1.45315206 : f32
    %105 = vector.broadcast %cst_30 : f32 to vector<32x64xf32>
    %106 = arith.addf %104, %105 : vector<32x64xf32>
    %107 = arith.mulf %106, %102 : vector<32x64xf32>
    %cst_31 = arith.constant 1.42141378 : f32
    %108 = vector.broadcast %cst_31 : f32 to vector<32x64xf32>
    %109 = arith.addf %107, %108 : vector<32x64xf32>
    %110 = arith.mulf %109, %102 : vector<32x64xf32>
    %cst_32 = arith.constant -0.284496725 : f32
    %111 = vector.broadcast %cst_32 : f32 to vector<32x64xf32>
    %112 = arith.addf %110, %111 : vector<32x64xf32>
    %113 = arith.mulf %112, %102 : vector<32x64xf32>
    %cst_33 = arith.constant 0.254829586 : f32
    %114 = vector.broadcast %cst_33 : f32 to vector<32x64xf32>
    %115 = arith.addf %113, %114 : vector<32x64xf32>
    %116 = arith.mulf %115, %102 : vector<32x64xf32>
    %cst_34 = arith.constant 0.000000e+00 : f32
    %117 = vector.broadcast %cst_34 : f32 to vector<32x64xf32>
    %118 = arith.subf %117, %97 : vector<32x64xf32>
    %119 = arith.mulf %118, %97 : vector<32x64xf32>
    %120 = math.exp %119 : vector<32x64xf32>
    %121 = arith.mulf %116, %120 : vector<32x64xf32>
    %cst_35 = arith.constant 1.000000e+00 : f32
    %122 = vector.broadcast %cst_35 : f32 to vector<32x64xf32>
    %123 = arith.subf %122, %121 : vector<32x64xf32>
    %cst_36 = arith.constant 0.000000e+00 : f32
    %124 = vector.broadcast %cst_36 : f32 to vector<32x64xf32>
    %125 = arith.cmpf olt, %96, %124 : vector<32x64xf32>
    %cst_37 = arith.constant 0.000000e+00 : f32
    %126 = vector.broadcast %cst_37 : f32 to vector<32x64xf32>
    %127 = arith.subf %126, %123 : vector<32x64xf32>
    %128 = arith.select %125, %127, %123 : vector<32x64xi1>, vector<32x64xf32>
    %cst_38 = arith.constant 1.000000e+00 : f32
    %129 = vector.broadcast %cst_38 : f32 to vector<32x64xf32>
    %130 = arith.addf %129, %128 : vector<32x64xf32>
    %131 = arith.mulf %94, %130 : vector<32x64xf32>
    %132 = arith.truncf %131 : vector<32x64xf32> to vector<32x64xbf16>
    %cst_39 = arith.constant dense<0.000000e+00> : vector<32x32xf32>
    %133 = tpu.matmul %132, %4, %cst_39 {dimension_numbers = #tpu.dot_dimension_numbers<[1], [0], [0], [1], [0, 0, 1, 1], [], []>} : vector<32x64xbf16>, vector<64x32xbf16>, vector<32x32xf32> -> vector<32x32xf32>
    %134 = vector.broadcast %11 : vector<1x32xf32> to vector<32x32xf32>
    %135 = arith.addf %133, %134 : vector<32x32xf32>
    %136 = arith.addf %88, %135 : vector<32x32xf32>
    %cst_40 = arith.constant dense<0.000000e+00> : vector<32xf32>
    %137 = vector.multi_reduction <add>, %136, %cst_40 [0] : vector<32x32xf32> to vector<32xf32>
    %138 = vector.shape_cast %137 : vector<32xf32> to vector<1x32xf32>
    %cst_41 = arith.constant 3.125000e-02 : f32
    %139 = vector.broadcast %cst_41 : f32 to vector<1x32xf32>
    %140 = arith.mulf %138, %139 : vector<1x32xf32>
    %141 = vector.broadcast %140 : vector<1x32xf32> to vector<32x32xf32>
    %142 = arith.subf %136, %141 : vector<32x32xf32>
    %143 = arith.mulf %142, %142 : vector<32x32xf32>
    %cst_42 = arith.constant dense<0.000000e+00> : vector<32xf32>
    %144 = vector.multi_reduction <add>, %143, %cst_42 [0] : vector<32x32xf32> to vector<32xf32>
    %145 = vector.shape_cast %144 : vector<32xf32> to vector<1x32xf32>
    %cst_43 = arith.constant 3.125000e-02 : f32
    %146 = vector.broadcast %cst_43 : f32 to vector<1x32xf32>
    %147 = arith.mulf %145, %146 : vector<1x32xf32>
    %cst_44 = arith.constant 9.99999974E-6 : f32
    %148 = vector.broadcast %cst_44 : f32 to vector<1x32xf32>
    %149 = arith.addf %147, %148 : vector<1x32xf32>
    %150 = math.rsqrt %149 : vector<1x32xf32>
    %151 = arith.mulf %150, %12 : vector<1x32xf32>
    %152 = vector.broadcast %151 : vector<1x32xf32> to vector<32x32xf32>
    %153 = arith.mulf %142, %152 : vector<32x32xf32>
    %154 = vector.broadcast %13 : vector<1x32xf32> to vector<32x32xf32>
    %155 = arith.addf %153, %154 : vector<32x32xf32>
    %c0_45 = arith.constant 0 : index
    %c0_46 = arith.constant 0 : index
    %156 = vector.load %arg4[%c0_45, %c0_46] : memref<32x32xf32, #tpu.memory_space<vmem>>, vector<32x32xf32>
    tpu.vector_store %arg4[%c0_45, %c0_46], %155 {strides = array<i32>} : memref<32x32xf32, #tpu.memory_space<vmem>>, vector<32x32xf32>,
    return
  }
  func.func @transform_0(%arg0: i32) -> (i32, i32) {
    %c0_i32 = arith.constant 0 : i32
    %c0_i32_0 = arith.constant 0 : i32
    %c0_i32_1 = arith.constant 0 : i32
    return %c0_i32, %c0_i32_0 : i32, i32
  }
  func.func @transform_1(%arg0: i32) -> (i32, i32) {
    %c0_i32 = arith.constant 0 : i32
    %c0_i32_0 = arith.constant 0 : i32
    %c0_i32_1 = arith.constant 0 : i32
    return %c0_i32, %c0_i32_0 : i32, i32
  }
  func.func @transform_2(%arg0: i32) -> (i32, i32) {
    %c0_i32 = arith.constant 0 : i32
    %c0_i32_0 = arith.constant 0 : i32
    %c0_i32_1 = arith.constant 0 : i32
    return %c0_i32, %c0_i32_0 : i32, i32
  }
  func.func @transform_3(%arg0: i32) -> (i32, i32) {
    %c0_i32 = arith.constant 0 : i32
    %c0_i32_0 = arith.constant 0 : i32
    %c0_i32_1 = arith.constant 0 : i32
    return %c0_i32, %c0_i32_0 : i32, i32
  }
}

</mosaic_0001>

<llo_original>
// kernel: tst_encoder_layer.1
$region0: #{tst_encoder_layer.1}
  #allocation0 [shape = 'u32[]', space=smem, size = 0x4, offset = 0x4, fixed_abs, tag = 'smem constant byte address 0x4 - core index']
  #allocation1 [shape = 'u32[144,128]{1,0:T(1,128)}', space=vmem, size = 0x12000, scoped, tag = 'internal scratch']
  %s0 = inlined_call_operand.hbm [shape: f32[32,32], index: 0, kind: input, shape index: {}]
  %s1 = inlined_call_operand.hbm [shape: bf16[160,128], index: 1, kind: input, shape index: {}]
  %s2 = inlined_call_operand.hbm [shape: f32[8,128], index: 2, kind: input, shape index: {}]
  %s3 = inlined_call_operand.hbm [shape: f32[32,32], index: 3, kind: output, shape index: {}]
  %s4 = sld [smem:[#allocation0]]
  $region34: #{tst_encoder_layer.1} parent=0
    _
  %s6 = ssub.s32 1, %s4
  %s7 = scalar_select 0, %s6, %s4
  $region1: #{tst_encoder_layer.1} parent=0
    #allocation2 [shape = 'u8[16384]{0}', space=vmem, size = 0x4000, scoped, tag = 'input window, operand 0, single buffered']
    #allocation3 [shape = 's32[1]{0}', space=sflag, size = 0x4, scoped, tag = 'scoped memory for tst_encoder_layer.1']
    #allocation4 [shape = 's32[1]{0}', space=sflag, size = 0x4, scoped, tag = 'scoped memory for tst_encoder_layer.1']
    #allocation5 [shape = 'u8[40960]{0}', space=vmem, size = 0xa000, scoped, tag = 'input window, operand 1, single buffered']
    #allocation6 [shape = 's32[1]{0}', space=sflag, size = 0x4, scoped, tag = 'scoped memory for tst_encoder_layer.1']
    #allocation7 [shape = 'u8[4096]{0}', space=vmem, size = 0x1000, scoped, tag = 'input window, operand 2, single buffered']
    #allocation8 [shape = 'u8[16384]{0}', space=vmem, size = 0x4000, scoped, tag = 'output window, operand 0, single buffered']
    %8 = vsyncpa [#allocation3], 0
    %9 = vsyncpa [#allocation6], 0
    %10 = vsyncpa [#allocation4], 0
    // Predicated region
    $region2: #{tst_encoder_layer.1} parent=1 // pred_check
      _
    $region3: #{tst_encoder_layer.1} parent=1 // pred_check_branch
      %12 = sbr.rel (0) target = $region5
    $region4: #{tst_encoder_layer.1} parent=1 // pred_region
      %s14 = ssub.s32 512, 512
      %15 = vsyncadd [#allocation3], %s14
      %s16 = sshll.u32 [#allocation2], 4
      %s17 = int_to_ptr.vmem [resolvable:$true] %s16
      %22 = dma.hbm_to_vmem [thread:$0]  %s0, 512, %s17, [#allocation3], 128, 128, 8
    $region5: #{tst_encoder_layer.1} parent=1 // pred_fallthru
      _
    // Predicated region
    $region6: #{tst_encoder_layer.1} parent=1 // pred_check
      _
    $region7: #{tst_encoder_layer.1} parent=1 // pred_check_branch
      %24 = sbr.rel (0) target = $region9
    $region8: #{tst_encoder_layer.1} parent=1 // pred_region
      %s26 = ssub.s32 1280, 1280
      %27 = vsyncadd [#allocation6], %s26
      %s28 = sshll.u32 [#allocation5], 4
      %s29 = int_to_ptr.vmem [resolvable:$true] %s28
      %34 = dma.hbm_to_vmem [thread:$0]  %s1, 1280, %s29, [#allocation6], 64, 64, 4
    $region9: #{tst_encoder_layer.1} parent=1 // pred_fallthru
      _
    // Predicated region
    $region10: #{tst_encoder_layer.1} parent=1 // pred_check
      _
    $region11: #{tst_encoder_layer.1} parent=1 // pred_check_branch
      %36 = sbr.rel (0) target = $region13
    $region12: #{tst_encoder_layer.1} parent=1 // pred_region
      %s38 = ssub.s32 128, 128
      %39 = vsyncadd [#allocation6], %s38
      %s41 = sshll.u32 [#allocation7], 4
      %s42 = int_to_ptr.vmem [resolvable:$true] %s41
      %44 = dma.hbm_to_vmem [thread:$0]  %s2, 128, %s42, [#allocation6]
    $region13: #{tst_encoder_layer.1} parent=1 // pred_fallthru
      _
    // Predicated region
    $region14: #{tst_encoder_layer.1} parent=1 // pred_check
      _
    $region15: #{tst_encoder_layer.1} parent=1 // pred_check_branch
      %46 = sbr.rel (0) target = $region17
    $region16: #{tst_encoder_layer.1} parent=1 // pred_region
      %47 = dma.done [#allocation3], 512
    $region17: #{tst_encoder_layer.1} parent=1 // pred_fallthru
      _
    // Predicated region
    $region18: #{tst_encoder_layer.1} parent=1 // pred_check
      _
    $region19: #{tst_encoder_layer.1} parent=1 // pred_check_branch
      %49 = sbr.rel (0) target = $region21
    $region20: #{tst_encoder_layer.1} parent=1 // pred_region
      %50 = dma.done [#allocation6], 1280
    $region21: #{tst_encoder_layer.1} parent=1 // pred_fallthru
      _
    // Predicated region
    $region22: #{tst_encoder_layer.1} parent=1 // pred_check
      _
    $region23: #{tst_encoder_layer.1} parent=1 // pred_check_branch
      %52 = sbr.rel (0) target = $region25
    $region24: #{tst_encoder_layer.1} parent=1 // pred_region
      %53 = dma.done [#allocation6], 128
    $region25: #{tst_encoder_layer.1} parent=1 // pred_fallthru
      _
    %v55 = vld [vmem:[#allocation2] sm:$0xff]
    %v56 = vld [vmem:[#allocation2 + $0x8] sm:$0xff]
    %v57 = vld [vmem:[#allocation2 + $0x10] sm:$0xff]
    %v58 = vld [vmem:[#allocation2 + $0x18] sm:$0xff]
    %v59 = vld [vmem:[#allocation5] sm:$0xf]
    %v60 = vld [vmem:[#allocation5 + $0x4] sm:$0xf]
    %v61 = vld [vmem:[#allocation5 + $0x8] sm:$0xf]
    %v62 = vld [vmem:[#allocation5 + $0xc] sm:$0xf]
    %v63 = vld [vmem:[#allocation5 + $0x10] sm:$0xf]
    %v64 = vld [vmem:[#allocation5 + $0x14] sm:$0xf]
    %v65 = vld [vmem:[#allocation5 + $0x18] sm:$0xf]
    %v66 = vld [vmem:[#allocation5 + $0x1c] sm:$0xf]
    %v67 = vld [vmem:[#allocation5 + $0x20] sm:$0xf]
    %v68 = vld [vmem:[#allocation5 + $0x24] sm:$0xf]
    %v69 = vld [vmem:[#allocation5 + $0x28] sm:$0xf]
    %v70 = vld [vmem:[#allocation5 + $0x2c] sm:$0xf]
    %v71 = vld [vmem:[#allocation5 + $0x30] sm:$0xf]
    %v72 = vld [vmem:[#allocation5 + $0x34] sm:$0xf]
    %v73 = vld [vmem:[#allocation5 + $0x38] sm:$0xf]
    %v74 = vld [vmem:[#allocation5 + $0x3c] sm:$0xf]
    %v75 = vld [vmem:[#allocation5 + $0x40] sm:$0xf]
    %v76 = vld [vmem:[#allocation5 + $0x44] sm:$0xf]
    %v77 = vld [vmem:[#allocation5 + $0x48] sm:$0xf]
    %v78 = vld [vmem:[#allocation5 + $0x4c] sm:$0xf]
    %v79 = vld [vmem:[#allocation7] sm:$0xff]
    %v80 = vpack.c.bf16 %v56, %v55
    %v81 = vpack.c.bf16 %v58, %v57
    %v82 = vlaneseq
    %v83 = vshrl.u32 %v82, 7
    %v84 = vsub.s32 0, %v83
    %v85 = vrot.slane %v79, %v84
    %v90 = vunpack.c.l.b16 %v59
    %v91 = vunpack.c.l.b16 %v60
    %v92 = vunpack.c.l.b16 %v61
    %v93 = vunpack.c.l.b16 %v62
    %v94 = vpack.c.b16 %v91, %v90
    %v95 = vpack.c.b16 %v93, %v92
    %vm98 = vcmask 261120
    %v100 = vsel %vm98, %v80, 0
    %v103 = vsel %vm98, %v81, 0
    %105 = vmatprep.subr.bf16.mxu0 0
    %106 = vmatpush1.bf16.msra.mxu0 0
    %107 = vmatprep.subr.bf16.mxu0 0
    %108 = vmatpush1.bf16.msra.mxu0 0
    %109 = vmatprep.subr.bf16.mxu0 0
    %110 = vmatpush1.bf16.msra.mxu0 0
    %111 = vmatprep.subr.bf16.mxu0 0
    %112 = vmatpush1.bf16.msra.mxu0 0
    %113 = vmatprep.subr.bf16.mxu0 0
    %114 = vmatpush1.bf16.msra.mxu0 0
    %115 = vmatprep.subr.bf16.mxu0 0
    %116 = vmatpush1.bf16.msra.mxu0 0
    %117 = vmatprep.subr.bf16.mxu0 0
    %118 = vmatpush1.bf16.msra.mxu0 %v95
    %119 = vmatprep.subr.bf16.mxu0 0
    %120 = vmatpush1.bf16.msra.mxu0 %v94
    %121 = vmatprep.subr.bf16.mxu0 0
    %122 = vmatpush2.bf16.msra.mxu0 0
    %123 = vmatprep.subr.bf16.mxu0 0
    %124 = vmatpush2.bf16.msra.mxu0 0
    %125 = vmatprep.subr.bf16.mxu0 0
    %126 = vmatpush2.bf16.msra.mxu0 0
    %127 = vmatprep.subr.bf16.mxu0 0
    %128 = vmatpush2.bf16.msra.mxu0 0
    %129 = vmatprep.subr.bf16.mxu0 0
    %130 = vmatpush2.bf16.msra.mxu0 0
    %131 = vmatprep.subr.bf16.mxu0 0
    %132 = vmatpush2.bf16.msra.mxu0 0
    %133 = vmatprep.subr.bf16.mxu0 0
    %134 = vmatpush2.bf16.msra.mxu0 0
    %135 = vmatprep.subr.bf16.mxu0 0
    %136 = vmatpush2.bf16.msra.mxu0 0
    %137 = vmatprep.mubr.bf16.mxu0 0
    %138 = vmatmul.mubr.bf16.gmra.mxu0 %v100
    %v139 = vpop.f32.mrf.mxu0
    %v140 = vadd.f32 %v85, %v139
    %v141 = vpop.f32.mrf.mxu0
    %v142 = vpop.f32.mrf.mxu0
    %v143 = vadd.f32 %v85, %v142
    %v144 = vpop.f32.mrf.mxu0
    %145 = vmatprep.mubr.bf16.mxu0 0
    %146 = vmatmul.mubr.bf16.gmra.mxu0 %v103
    %v147 = vpop.f32.mrf.mxu0
    %v148 = vadd.f32 %v85, %v147
    %v149 = vpop.f32.mrf.mxu0
    %v150 = vpop.f32.mrf.mxu0
    %v151 = vadd.f32 %v85, %v150
    %v152 = vpop.f32.mrf.mxu0
    %153 = vdwg.mxu0
    %v154 = vpack.c.bf16 %v143, %v140
    %v155 = vpack.c.bf16 %v151, %v148
    %157 = vrot.lane.b32.xlu0 %v154, 96
    %v158 = vpop.permute.xlu0 %157
    %vm159 = vcmask 64512
    %v161 = vsel %vm159, %v154, 0
    %v164 = vsel %vm159, %v158, 0
    %166 = vmatprep.subr.bf16.mxu0 0
    %167 = vmatpush1.bf16.xpose.msra.mxu0 0
    %168 = vmatprep.subr.bf16.mxu0 0
    %169 = vmatpush1.bf16.xpose.msra.mxu0 0
    %170 = vmatprep.subr.bf16.mxu0 0
    %171 = vmatpush1.bf16.xpose.msra.mxu0 0
    %172 = vmatprep.subr.bf16.mxu0 0
    %173 = vmatpush1.bf16.xpose.msra.mxu0 0
    %174 = vmatprep.subr.bf16.mxu0 0
    %175 = vmatpush1.bf16.xpose.msra.mxu0 0
    %176 = vmatprep.subr.bf16.mxu0 0
    %177 = vmatpush1.bf16.xpose.msra.mxu0 0
    %178 = vmatprep.subr.bf16.mxu0 0
    %179 = vmatpush1.bf16.xpose.msra.mxu0 0
    %180 = vmatprep.subr.bf16.mxu0 0
    %181 = vmatpush1.bf16.xpose.msra.mxu0 %v164
    %182 = vmatprep.subr.bf16.mxu0 0
    %183 = vmatpush2.bf16.xpose.msra.mxu0 0
    %184 = vmatprep.subr.bf16.mxu0 0
    %185 = vmatpush2.bf16.xpose.msra.mxu0 0
    %186 = vmatprep.subr.bf16.mxu0 0
    %187 = vmatpush2.bf16.xpose.msra.mxu0 0
    %188 = vmatprep.subr.bf16.mxu0 0
    %189 = vmatpush2.bf16.xpose.msra.mxu0 0
    %190 = vmatprep.subr.bf16.mxu0 0
    %191 = vmatpush2.bf16.xpose.msra.mxu0 0
    %192 = vmatprep.subr.bf16.mxu0 0
    %193 = vmatpush2.bf16.xpose.msra.mxu0 0
    %194 = vmatprep.subr.bf16.mxu0 0
    %195 = vmatpush2.bf16.xpose.msra.mxu0 0
    %196 = vmatprep.subr.bf16.mxu0 0
    %197 = vmatpush2.bf16.xpose.msra.mxu0 0
    %198 = vmatprep.mubr.bf16.mxu0 0
    %199 = vmatmul.mubr.bf16.gmra.mxu0 %v161
    %v200 = vpop.f32.mrf.mxu0
    %v201 = vadd.f32 0.0, %v200
    %v202 = vpop.f32.mrf.mxu0
    %v203 = vpop.f32.mrf.mxu0
    %v204 = vadd.f32 0.0, %v203
    %v205 = vpop.f32.mrf.mxu0
    %206 = vdwg.mxu0
    %208 = vrot.lane.b32.xlu0 %v155, 96
    %v209 = vpop.permute.xlu0 %208
    %v211 = vsel %vm159, %v155, 0
    %v214 = vsel %vm159, %v209, 0
    %216 = vmatprep.subr.bf16.mxu0 0
    %217 = vmatpush1.bf16.xpose.msra.mxu0 0
    %218 = vmatprep.subr.bf16.mxu0 0
    %219 = vmatpush1.bf16.xpose.msra.mxu0 0
    %220 = vmatprep.subr.bf16.mxu0 0
    %221 = vmatpush1.bf16.xpose.msra.mxu0 0
    %222 = vmatprep.subr.bf16.mxu0 0
    %223 = vmatpush1.bf16.xpose.msra.mxu0 0
    %224 = vmatprep.subr.bf16.mxu0 0
    %225 = vmatpush1.bf16.xpose.msra.mxu0 0
    %226 = vmatprep.subr.bf16.mxu0 0
    %227 = vmatpush1.bf16.xpose.msra.mxu0 0
    %228 = vmatprep.subr.bf16.mxu0 0
    %229 = vmatpush1.bf16.xpose.msra.mxu0 0
    %230 = vmatprep.subr.bf16.mxu0 0
    %231 = vmatpush1.bf16.xpose.msra.mxu0 %v214
    %232 = vmatprep.subr.bf16.mxu0 0
    %233 = vmatpush2.bf16.xpose.msra.mxu0 0
    %234 = vmatprep.subr.bf16.mxu0 0
    %235 = vmatpush2.bf16.xpose.msra.mxu0 0
    %236 = vmatprep.subr.bf16.mxu0 0
    %237 = vmatpush2.bf16.xpose.msra.mxu0 0
    %238 = vmatprep.subr.bf16.mxu0 0
    %239 = vmatpush2.bf16.xpose.msra.mxu0 0
    %240 = vmatprep.subr.bf16.mxu0 0
    %241 = vmatpush2.bf16.xpose.msra.mxu0 0
    %242 = vmatprep.subr.bf16.mxu0 0
    %243 = vmatpush2.bf16.xpose.msra.mxu0 0
    %244 = vmatprep.subr.bf16.mxu0 0
    %245 = vmatpush2.bf16.xpose.msra.mxu0 0
    %246 = vmatprep.subr.bf16.mxu0 0
    %247 = vmatpush2.bf16.xpose.msra.mxu0 0
    %248 = vmatprep.mubr.bf16.mxu0 0
    %249 = vmatmul.mubr.bf16.gmra.mxu0 %v211
    %v250 = vpop.f32.mrf.mxu0
    %v251 = vadd.f32 0.0, %v250
    %v252 = vpop.f32.mrf.mxu0
    %v253 = vpop.f32.mrf.mxu0
    %v254 = vadd.f32 0.0, %v253
    %v255 = vpop.f32.mrf.mxu0
    %256 = vdwg.mxu0
    %257 = vrot.lane.b32.xlu0 %v154, 120
    %v258 = vpop.permute.xlu0 %257
    %259 = vrot.lane.b32.xlu0 %v154, 88
    %v260 = vpop.permute.xlu0 %259
    %v262 = vsel %vm159, %v258, 0
    %v265 = vsel %vm159, %v260, 0
    %267 = vmatprep.subr.bf16.mxu0 0
    %268 = vmatpush1.bf16.xpose.msra.mxu0 0
    %269 = vmatprep.subr.bf16.mxu0 0
    %270 = vmatpush1.bf16.xpose.msra.mxu0 0
    %271 = vmatprep.subr.bf16.mxu0 0
    %272 = vmatpush1.bf16.xpose.msra.mxu0 0
    %273 = vmatprep.subr.bf16.mxu0 0
    %274 = vmatpush1.bf16.xpose.msra.mxu0 0
    %275 = vmatprep.subr.bf16.mxu0 0
    %276 = vmatpush1.bf16.xpose.msra.mxu0 0
    %277 = vmatprep.subr.bf16.mxu0 0
    %278 = vmatpush1.bf16.xpose.msra.mxu0 0
    %279 = vmatprep.subr.bf16.mxu0 0
    %280 = vmatpush1.bf16.xpose.msra.mxu0 0
    %281 = vmatprep.subr.bf16.mxu0 0
    %282 = vmatpush1.bf16.xpose.msra.mxu0 %v265
    %283 = vmatprep.subr.bf16.mxu0 0
    %284 = vmatpush2.bf16.xpose.msra.mxu0 0
    %285 = vmatprep.subr.bf16.mxu0 0
    %286 = vmatpush2.bf16.xpose.msra.mxu0 0
    %287 = vmatprep.subr.bf16.mxu0 0
    %288 = vmatpush2.bf16.xpose.msra.mxu0 0
    %289 = vmatprep.subr.bf16.mxu0 0
    %290 = vmatpush2.bf16.xpose.msra.mxu0 0
    %291 = vmatprep.subr.bf16.mxu0 0
    %292 = vmatpush2.bf16.xpose.msra.mxu0 0
    %293 = vmatprep.subr.bf16.mxu0 0
    %294 = vmatpush2.bf16.xpose.msra.mxu0 0
    %295 = vmatprep.subr.bf16.mxu0 0
    %296 = vmatpush2.bf16.xpose.msra.mxu0 0
    %297 = vmatprep.subr.bf16.mxu0 0
    %298 = vmatpush2.bf16.xpose.msra.mxu0 0
    %299 = vmatprep.mubr.bf16.mxu0 0
    %300 = vmatmul.mubr.bf16.gmra.mxu0 %v262
    %v301 = vpop.f32.mrf.mxu0
    %v302 = vadd.f32 0.0, %v301
    %v303 = vpop.f32.mrf.mxu0
    %v304 = vpop.f32.mrf.mxu0
    %v305 = vadd.f32 0.0, %v304
    %v306 = vpop.f32.mrf.mxu0
    %307 = vdwg.mxu0
    %308 = vrot.lane.b32.xlu0 %v155, 120
    %v309 = vpop.permute.xlu0 %308
    %310 = vrot.lane.b32.xlu0 %v155, 88
    %v311 = vpop.permute.xlu0 %310
    %v313 = vsel %vm159, %v309, 0
    %v316 = vsel %vm159, %v311, 0
    %318 = vmatprep.subr.bf16.mxu0 0
    %319 = vmatpush1.bf16.xpose.msra.mxu0 0
    %320 = vmatprep.subr.bf16.mxu0 0
    %321 = vmatpush1.bf16.xpose.msra.mxu0 0
    %322 = vmatprep.subr.bf16.mxu0 0
    %323 = vmatpush1.bf16.xpose.msra.mxu0 0
    %324 = vmatprep.subr.bf16.mxu0 0
    %325 = vmatpush1.bf16.xpose.msra.mxu0 0
    %326 = vmatprep.subr.bf16.mxu0 0
    %327 = vmatpush1.bf16.xpose.msra.mxu0 0
    %328 = vmatprep.subr.bf16.mxu0 0
    %329 = vmatpush1.bf16.xpose.msra.mxu0 0
    %330 = vmatprep.subr.bf16.mxu0 0
    %331 = vmatpush1.bf16.xpose.msra.mxu0 0
    %332 = vmatprep.subr.bf16.mxu0 0
    %333 = vmatpush1.bf16.xpose.msra.mxu0 %v316
    %334 = vmatprep.subr.bf16.mxu0 0
    %335 = vmatpush2.bf16.xpose.msra.mxu0 0
    %336 = vmatprep.subr.bf16.mxu0 0
    %337 = vmatpush2.bf16.xpose.msra.mxu0 0
    %338 = vmatprep.subr.bf16.mxu0 0
    %339 = vmatpush2.bf16.xpose.msra.mxu0 0
    %340 = vmatprep.subr.bf16.mxu0 0
    %341 = vmatpush2.bf16.xpose.msra.mxu0 0
    %342 = vmatprep.subr.bf16.mxu0 0
    %343 = vmatpush2.bf16.xpose.msra.mxu0 0
    %344 = vmatprep.subr.bf16.mxu0 0
    %345 = vmatpush2.bf16.xpose.msra.mxu0 0
    %346 = vmatprep.subr.bf16.mxu0 0
    %347 = vmatpush2.bf16.xpose.msra.mxu0 0
    %348 = vmatprep.subr.bf16.mxu0 0
    %349 = vmatpush2.bf16.xpose.msra.mxu0 0
    %350 = vmatprep.mubr.bf16.mxu0 0
    %351 = vmatmul.mubr.bf16.gmra.mxu0 %v313
    %v352 = vpop.f32.mrf.mxu0
    %v353 = vadd.f32 0.0, %v352
    %v354 = vpop.f32.mrf.mxu0
    %v355 = vpop.f32.mrf.mxu0
    %v356 = vadd.f32 0.0, %v355
    %v357 = vpop.f32.mrf.mxu0
    %358 = vdwg.mxu0
    %359 = vrot.lane.b32.xlu0 %v154, 112
    %v360 = vpop.permute.xlu0 %359
    %361 = vrot.lane.b32.xlu0 %v154, 80
    %v362 = vpop.permute.xlu0 %361
    %v364 = vsel %vm159, %v360, 0
    %v367 = vsel %vm159, %v362, 0
    %369 = vmatprep.subr.bf16.mxu0 0
    %370 = vmatpush1.bf16.xpose.msra.mxu0 0
    %371 = vmatprep.subr.bf16.mxu0 0
    %372 = vmatpush1.bf16.xpose.msra.mxu0 0
    %373 = vmatprep.subr.bf16.mxu0 0
    %374 = vmatpush1.bf16.xpose.msra.mxu0 0
    %375 = vmatprep.subr.bf16.mxu0 0
    %376 = vmatpush1.bf16.xpose.msra.mxu0 0
    %377 = vmatprep.subr.bf16.mxu0 0
    %378 = vmatpush1.bf16.xpose.msra.mxu0 0
    %379 = vmatprep.subr.bf16.mxu0 0
    %380 = vmatpush1.bf16.xpose.msra.mxu0 0
    %381 = vmatprep.subr.bf16.mxu0 0
    %382 = vmatpush1.bf16.xpose.msra.mxu0 0
    %383 = vmatprep.subr.bf16.mxu0 0
    %384 = vmatpush1.bf16.xpose.msra.mxu0 %v367
    %385 = vmatprep.subr.bf16.mxu0 0
    %386 = vmatpush2.bf16.xpose.msra.mxu0 0
    %387 = vmatprep.subr.bf16.mxu0 0
    %388 = vmatpush2.bf16.xpose.msra.mxu0 0
    %389 = vmatprep.subr.bf16.mxu0 0
    %390 = vmatpush2.bf16.xpose.msra.mxu0 0
    %391 = vmatprep.subr.bf16.mxu0 0
    %392 = vmatpush2.bf16.xpose.msra.mxu0 0
    %393 = vmatprep.subr.bf16.mxu0 0
    %394 = vmatpush2.bf16.xpose.msra.mxu0 0
    %395 = vmatprep.subr.bf16.mxu0 0
    %396 = vmatpush2.bf16.xpose.msra.mxu0 0
    %397 = vmatprep.subr.bf16.mxu0 0
    %398 = vmatpush2.bf16.xpose.msra.mxu0 0
    %399 = vmatprep.subr.bf16.mxu0 0
    %400 = vmatpush2.bf16.xpose.msra.mxu0 0
    %401 = vmatprep.mubr.bf16.mxu0 0
    %402 = vmatmul.mubr.bf16.gmra.mxu0 %v364
    %v403 = vpop.f32.mrf.mxu0
    %v404 = vadd.f32 0.0, %v403
    %v405 = vpop.f32.mrf.mxu0
    %v406 = vpop.f32.mrf.mxu0
    %v407 = vadd.f32 0.0, %v406
    %v408 = vpop.f32.mrf.mxu0
    %409 = vdwg.mxu0
    %410 = vrot.lane.b32.xlu0 %v155, 112
    %v411 = vpop.permute.xlu0 %410
    %412 = vrot.lane.b32.xlu0 %v155, 80
    %v413 = vpop.permute.xlu0 %412
    %v415 = vsel %vm159, %v411, 0
    %v418 = vsel %vm159, %v413, 0
    %420 = vmatprep.subr.bf16.mxu0 0
    %421 = vmatpush1.bf16.xpose.msra.mxu0 0
    %422 = vmatprep.subr.bf16.mxu0 0
    %423 = vmatpush1.bf16.xpose.msra.mxu0 0
    %424 = vmatprep.subr.bf16.mxu0 0
    %425 = vmatpush1.bf16.xpose.msra.mxu0 0
    %426 = vmatprep.subr.bf16.mxu0 0
    %427 = vmatpush1.bf16.xpose.msra.mxu0 0
    %428 = vmatprep.subr.bf16.mxu0 0
    %429 = vmatpush1.bf16.xpose.msra.mxu0 0
    %430 = vmatprep.subr.bf16.mxu0 0
    %431 = vmatpush1.bf16.xpose.msra.mxu0 0
    %432 = vmatprep.subr.bf16.mxu0 0
    %433 = vmatpush1.bf16.xpose.msra.mxu0 0
    %434 = vmatprep.subr.bf16.mxu0 0
    %435 = vmatpush1.bf16.xpose.msra.mxu0 %v418
    %436 = vmatprep.subr.bf16.mxu0 0
    %437 = vmatpush2.bf16.xpose.msra.mxu0 0
    %438 = vmatprep.subr.bf16.mxu0 0
    %439 = vmatpush2.bf16.xpose.msra.mxu0 0
    %440 = vmatprep.subr.bf16.mxu0 0
    %441 = vmatpush2.bf16.xpose.msra.mxu0 0
    %442 = vmatprep.subr.bf16.mxu0 0
    %443 = vmatpush2.bf16.xpose.msra.mxu0 0
    %444 = vmatprep.subr.bf16.mxu0 0
    %445 = vmatpush2.bf16.xpose.msra.mxu0 0
    %446 = vmatprep.subr.bf16.mxu0 0
    %447 = vmatpush2.bf16.xpose.msra.mxu0 0
    %448 = vmatprep.subr.bf16.mxu0 0
    %449 = vmatpush2.bf16.xpose.msra.mxu0 0
    %450 = vmatprep.subr.bf16.mxu0 0
    %451 = vmatpush2.bf16.xpose.msra.mxu0 0
    %452 = vmatprep.mubr.bf16.mxu0 0
    %453 = vmatmul.mubr.bf16.gmra.mxu0 %v415
    %v454 = vpop.f32.mrf.mxu0
    %v455 = vadd.f32 0.0, %v454
    %v456 = vpop.f32.mrf.mxu0
    %v457 = vpop.f32.mrf.mxu0
    %v458 = vadd.f32 0.0, %v457
    %v459 = vpop.f32.mrf.mxu0
    %460 = vdwg.mxu0
    %461 = vrot.lane.b32.xlu0 %v154, 104
    %v462 = vpop.permute.xlu0 %461
    %463 = vrot.lane.b32.xlu0 %v154, 72
    %v464 = vpop.permute.xlu0 %463
    %v466 = vsel %vm159, %v462, 0
    %v469 = vsel %vm159, %v464, 0
    %471 = vmatprep.subr.bf16.mxu0 0
    %472 = vmatpush1.bf16.xpose.msra.mxu0 0
    %473 = vmatprep.subr.bf16.mxu0 0
    %474 = vmatpush1.bf16.xpose.msra.mxu0 0
    %475 = vmatprep.subr.bf16.mxu0 0
    %476 = vmatpush1.bf16.xpose.msra.mxu0 0
    %477 = vmatprep.subr.bf16.mxu0 0
    %478 = vmatpush1.bf16.xpose.msra.mxu0 0
    %479 = vmatprep.subr.bf16.mxu0 0
    %480 = vmatpush1.bf16.xpose.msra.mxu0 0
    %481 = vmatprep.subr.bf16.mxu0 0
    %482 = vmatpush1.bf16.xpose.msra.mxu0 0
    %483 = vmatprep.subr.bf16.mxu0 0
    %484 = vmatpush1.bf16.xpose.msra.mxu0 0
    %485 = vmatprep.subr.bf16.mxu0 0
    %486 = vmatpush1.bf16.xpose.msra.mxu0 %v469
    %487 = vmatprep.subr.bf16.mxu0 0
    %488 = vmatpush2.bf16.xpose.msra.mxu0 0
    %489 = vmatprep.subr.bf16.mxu0 0
    %490 = vmatpush2.bf16.xpose.msra.mxu0 0
    %491 = vmatprep.subr.bf16.mxu0 0
    %492 = vmatpush2.bf16.xpose.msra.mxu0 0
    %493 = vmatprep.subr.bf16.mxu0 0
    %494 = vmatpush2.bf16.xpose.msra.mxu0 0
    %495 = vmatprep.subr.bf16.mxu0 0
    %496 = vmatpush2.bf16.xpose.msra.mxu0 0
    %497 = vmatprep.subr.bf16.mxu0 0
    %498 = vmatpush2.bf16.xpose.msra.mxu0 0
    %499 = vmatprep.subr.bf16.mxu0 0
    %500 = vmatpush2.bf16.xpose.msra.mxu0 0
    %501 = vmatprep.subr.bf16.mxu0 0
    %502 = vmatpush2.bf16.xpose.msra.mxu0 0
    %503 = vmatprep.mubr.bf16.mxu0 0
    %504 = vmatmul.mubr.bf16.gmra.mxu0 %v466
    %v505 = vpop.f32.mrf.mxu0
    %v506 = vadd.f32 0.0, %v505
    %v507 = vpop.f32.mrf.mxu0
    %v508 = vpop.f32.mrf.mxu0
    %v509 = vadd.f32 0.0, %v508
    %v510 = vpop.f32.mrf.mxu0
    %511 = vdwg.mxu0
    %512 = vrot.lane.b32.xlu0 %v155, 104
    %v513 = vpop.permute.xlu0 %512
    %514 = vrot.lane.b32.xlu0 %v155, 72
    %v515 = vpop.permute.xlu0 %514
    %v517 = vsel %vm159, %v513, 0
    %v520 = vsel %vm159, %v515, 0
    %522 = vmatprep.subr.bf16.mxu0 0
    %523 = vmatpush1.bf16.xpose.msra.mxu0 0
    %524 = vmatprep.subr.bf16.mxu0 0
    %525 = vmatpush1.bf16.xpose.msra.mxu0 0
    %526 = vmatprep.subr.bf16.mxu0 0
    %527 = vmatpush1.bf16.xpose.msra.mxu0 0
    %528 = vmatprep.subr.bf16.mxu0 0
    %529 = vmatpush1.bf16.xpose.msra.mxu0 0
    %530 = vmatprep.subr.bf16.mxu0 0
    %531 = vmatpush1.bf16.xpose.msra.mxu0 0
    %532 = vmatprep.subr.bf16.mxu0 0
    %533 = vmatpush1.bf16.xpose.msra.mxu0 0
    %534 = vmatprep.subr.bf16.mxu0 0
    %535 = vmatpush1.bf16.xpose.msra.mxu0 0
    %536 = vmatprep.subr.bf16.mxu0 0
    %537 = vmatpush1.bf16.xpose.msra.mxu0 %v520
    %538 = vmatprep.subr.bf16.mxu0 0
    %539 = vmatpush2.bf16.xpose.msra.mxu0 0
    %540 = vmatprep.subr.bf16.mxu0 0
    %541 = vmatpush2.bf16.xpose.msra.mxu0 0
    %542 = vmatprep.subr.bf16.mxu0 0
    %543 = vmatpush2.bf16.xpose.msra.mxu0 0
    %544 = vmatprep.subr.bf16.mxu0 0
    %545 = vmatpush2.bf16.xpose.msra.mxu0 0
    %546 = vmatprep.subr.bf16.mxu0 0
    %547 = vmatpush2.bf16.xpose.msra.mxu0 0
    %548 = vmatprep.subr.bf16.mxu0 0
    %549 = vmatpush2.bf16.xpose.msra.mxu0 0
    %550 = vmatprep.subr.bf16.mxu0 0
    %551 = vmatpush2.bf16.xpose.msra.mxu0 0
    %552 = vmatprep.subr.bf16.mxu0 0
    %553 = vmatpush2.bf16.xpose.msra.mxu0 0
    %554 = vmatprep.mubr.bf16.mxu0 0
    %555 = vmatmul.mubr.bf16.gmra.mxu0 %v517
    %v556 = vpop.f32.mrf.mxu0
    %v557 = vadd.f32 0.0, %v556
    %v558 = vpop.f32.mrf.mxu0
    %v559 = vpop.f32.mrf.mxu0
    %v560 = vadd.f32 0.0, %v559
    %v561 = vpop.f32.mrf.mxu0
    %562 = vdwg.mxu0
    %vm563 = vcmask 130048
    %v564 = vsel %vm563, %v201, -inf
    %565 = vmax.xlane.f32.xlu0 %v564
    %v566 = vpop.xlane.xlu0 %565
    %v567 = vsel %vm563, %v204, -inf
    %568 = vmax.xlane.f32.xlu0 %v567
    %v569 = vpop.xlane.xlu0 %568
    %v570 = vsel %vm563, %v251, -inf
    %571 = vmax.xlane.f32.xlu0 %v570
    %v572 = vpop.xlane.xlu0 %571
    %v573 = vsel %vm563, %v254, -inf
    %574 = vmax.xlane.f32.xlu0 %v573
    %v575 = vpop.xlane.xlu0 %574
    %v576 = vsel %vm563, %v302, -inf
    %577 = vmax.xlane.f32.xlu0 %v576
    %v578 = vpop.xlane.xlu0 %577
    %v579 = vsel %vm563, %v305, -inf
    %580 = vmax.xlane.f32.xlu0 %v579
    %v581 = vpop.xlane.xlu0 %580
    %v582 = vsel %vm563, %v353, -inf
    %583 = vmax.xlane.f32.xlu0 %v582
    %v584 = vpop.xlane.xlu0 %583
    %v585 = vsel %vm563, %v356, -inf
    %586 = vmax.xlane.f32.xlu0 %v585
    %v587 = vpop.xlane.xlu0 %586
    %v588 = vsel %vm563, %v404, -inf
    %589 = vmax.xlane.f32.xlu0 %v588
    %v590 = vpop.xlane.xlu0 %589
    %v591 = vsel %vm563, %v407, -inf
    %592 = vmax.xlane.f32.xlu0 %v591
    %v593 = vpop.xlane.xlu0 %592
    %v594 = vsel %vm563, %v455, -inf
    %595 = vmax.xlane.f32.xlu0 %v594
    %v596 = vpop.xlane.xlu0 %595
    %v597 = vsel %vm563, %v458, -inf
    %598 = vmax.xlane.f32.xlu0 %v597
    %v599 = vpop.xlane.xlu0 %598
    %v600 = vsel %vm563, %v506, -inf
    %601 = vmax.xlane.f32.xlu0 %v600
    %v602 = vpop.xlane.xlu0 %601
    %v603 = vsel %vm563, %v509, -inf
    %604 = vmax.xlane.f32.xlu0 %v603
    %v605 = vpop.xlane.xlu0 %604
    %v606 = vsel %vm563, %v557, -inf
    %607 = vmax.xlane.f32.xlu0 %v606
    %v608 = vpop.xlane.xlu0 %607
    %v609 = vsel %vm563, %v560, -inf
    %610 = vmax.xlane.f32.xlu0 %v609
    %v611 = vpop.xlane.xlu0 %610
    %v612 = vsub.f32 %v201, %v566
    %v613 = vsub.f32 %v204, %v569
    %v614 = vsub.f32 %v251, %v572
    %v615 = vsub.f32 %v254, %v575
    %v616 = vsub.f32 %v302, %v578
    %v617 = vsub.f32 %v305, %v581
    %v618 = vsub.f32 %v353, %v584
    %v619 = vsub.f32 %v356, %v587
    %v620 = vsub.f32 %v404, %v590
    %v621 = vsub.f32 %v407, %v593
    %v622 = vsub.f32 %v455, %v596
    %v623 = vsub.f32 %v458, %v599
    %v624 = vsub.f32 %v506, %v602
    %v625 = vsub.f32 %v509, %v605
    %v626 = vsub.f32 %v557, %v608
    %v627 = vsub.f32 %v560, %v611
    %v628 = vmul.f32 %v612, 1.442695
    %v629 = vpow.pop %v628
    %v630 = vmul.f32 %v613, 1.442695
    %v631 = vpow.pop %v630
    %v632 = vmul.f32 %v614, 1.442695
    %v633 = vpow.pop %v632
    %v634 = vmul.f32 %v615, 1.442695
    %v635 = vpow.pop %v634
    %v636 = vmul.f32 %v616, 1.442695
    %v637 = vpow.pop %v636
    %v638 = vmul.f32 %v617, 1.442695
    %v639 = vpow.pop %v638
    %v640 = vmul.f32 %v618, 1.442695
    %v641 = vpow.pop %v640
    %v642 = vmul.f32 %v619, 1.442695
    %v643 = vpow.pop %v642
    %v644 = vmul.f32 %v620, 1.442695
    %v645 = vpow.pop %v644
    %v646 = vmul.f32 %v621, 1.442695
    %v647 = vpow.pop %v646
    %v648 = vmul.f32 %v622, 1.442695
    %v649 = vpow.pop %v648
    %v650 = vmul.f32 %v623, 1.442695
    %v651 = vpow.pop %v650
    %v652 = vmul.f32 %v624, 1.442695
    %v653 = vpow.pop %v652
    %v654 = vmul.f32 %v625, 1.442695
    %v655 = vpow.pop %v654
    %v656 = vmul.f32 %v626, 1.442695
    %v657 = vpow.pop %v656
    %v658 = vmul.f32 %v627, 1.442695
    %v659 = vpow.pop %v658
    %v660 = vsel %vm563, %v629, 0.0
    %661 = vadd.xlane.f32.xlu0 %v660
    %v662 = vpop.xlane.xlu0 %661
    %v663 = vsel %vm563, %v631, 0.0
    %664 = vadd.xlane.f32.xlu0 %v663
    %v665 = vpop.xlane.xlu0 %664
    %v666 = vsel %vm563, %v633, 0.0
    %667 = vadd.xlane.f32.xlu0 %v666
    %v668 = vpop.xlane.xlu0 %667
    %v669 = vsel %vm563, %v635, 0.0
    %670 = vadd.xlane.f32.xlu0 %v669
    %v671 = vpop.xlane.xlu0 %670
    %v672 = vsel %vm563, %v637, 0.0
    %673 = vadd.xlane.f32.xlu0 %v672
    %v674 = vpop.xlane.xlu0 %673
    %v675 = vsel %vm563, %v639, 0.0
    %676 = vadd.xlane.f32.xlu0 %v675
    %v677 = vpop.xlane.xlu0 %676
    %v678 = vsel %vm563, %v641, 0.0
    %679 = vadd.xlane.f32.xlu0 %v678
    %v680 = vpop.xlane.xlu0 %679
    %v681 = vsel %vm563, %v643, 0.0
    %682 = vadd.xlane.f32.xlu0 %v681
    %v683 = vpop.xlane.xlu0 %682
    %v684 = vsel %vm563, %v645, 0.0
    %685 = vadd.xlane.f32.xlu0 %v684
    %v686 = vpop.xlane.xlu0 %685
    %v687 = vsel %vm563, %v647, 0.0
    %688 = vadd.xlane.f32.xlu0 %v687
    %v689 = vpop.xlane.xlu0 %688
    %v690 = vsel %vm563, %v649, 0.0
    %691 = vadd.xlane.f32.xlu0 %v690
    %v692 = vpop.xlane.xlu0 %691
    %v693 = vsel %vm563, %v651, 0.0
    %694 = vadd.xlane.f32.xlu0 %v693
    %v695 = vpop.xlane.xlu0 %694
    %v696 = vsel %vm563, %v653, 0.0
    %697 = vadd.xlane.f32.xlu0 %v696
    %v698 = vpop.xlane.xlu0 %697
    %v699 = vsel %vm563, %v655, 0.0
    %700 = vadd.xlane.f32.xlu0 %v699
    %v701 = vpop.xlane.xlu0 %700
    %v702 = vsel %vm563, %v657, 0.0
    %703 = vadd.xlane.f32.xlu0 %v702
    %v704 = vpop.xlane.xlu0 %703
    %v705 = vsel %vm563, %v659, 0.0
    %706 = vadd.xlane.f32.xlu0 %v705
    %v707 = vpop.xlane.xlu0 %706
    %v708 = vrcp.pop %v662
    %v709 = vrcp.pop %v665
    %v710 = vrcp.pop %v668
    %v711 = vrcp.pop %v671
    %v712 = vrcp.pop %v674
    %v713 = vrcp.pop %v677
    %v714 = vrcp.pop %v680
    %v715 = vrcp.pop %v683
    %v716 = vrcp.pop %v686
    %v717 = vrcp.pop %v689
    %v718 = vrcp.pop %v692
    %v719 = vrcp.pop %v695
    %v720 = vrcp.pop %v698
    %v721 = vrcp.pop %v701
    %v722 = vrcp.pop %v704
    %v723 = vrcp.pop %v707
    %v724 = vmul.f32 %v629, %v708
    %v725 = vmul.f32 %v631, %v709
    %v726 = vmul.f32 %v633, %v710
    %v727 = vmul.f32 %v635, %v711
    %v728 = vmul.f32 %v637, %v712
    %v729 = vmul.f32 %v639, %v713
    %v730 = vmul.f32 %v641, %v714
    %v731 = vmul.f32 %v643, %v715
    %v732 = vmul.f32 %v645, %v716
    %v733 = vmul.f32 %v647, %v717
    %v734 = vmul.f32 %v649, %v718
    %v735 = vmul.f32 %v651, %v719
    %v736 = vmul.f32 %v653, %v720
    %v737 = vmul.f32 %v655, %v721
    %v738 = vmul.f32 %v657, %v722
    %v739 = vmul.f32 %v659, %v723
    %v740 = vpack.c.bf16 %v725, %v724
    %v741 = vpack.c.bf16 %v727, %v726
    %v742 = vpack.c.bf16 %v729, %v728
    %v743 = vpack.c.bf16 %v731, %v730
    %v744 = vpack.c.bf16 %v733, %v732
    %v745 = vpack.c.bf16 %v735, %v734
    %v746 = vpack.c.bf16 %v737, %v736
    %v747 = vpack.c.bf16 %v739, %v738
    %748 = vrot.lane.b32.xlu0 %v154, 64
    %v749 = vpop.permute.xlu0 %748
    %v752 = vsel %vm563, %v740, 0
    %754 = vmatprep.subr.bf16.mxu0 0
    %755 = vmatpush1.bf16.msra.mxu0 0
    %756 = vmatprep.subr.bf16.mxu0 0
    %757 = vmatpush1.bf16.msra.mxu0 0
    %758 = vmatprep.subr.bf16.mxu0 0
    %759 = vmatpush1.bf16.msra.mxu0 0
    %760 = vmatprep.subr.bf16.mxu0 0
    %761 = vmatpush1.bf16.msra.mxu0 0
    %762 = vmatprep.subr.bf16.mxu0 0
    %763 = vmatpush1.bf16.msra.mxu0 0
    %764 = vmatprep.subr.bf16.mxu0 0
    %765 = vmatpush1.bf16.msra.mxu0 0
    %766 = vmatprep.subr.bf16.mxu0 0
    %767 = vmatpush1.bf16.msra.mxu0 0
    %768 = vmatprep.subr.bf16.mxu0 0
    %769 = vmatpush1.bf16.msra.mxu0 %v749
    %770 = vmatprep.subr.bf16.mxu0 0
    %771 = vmatpush2.bf16.msra.mxu0 0
    %772 = vmatprep.subr.bf16.mxu0 0
    %773 = vmatpush2.bf16.msra.mxu0 0
    %774 = vmatprep.subr.bf16.mxu0 0
    %775 = vmatpush2.bf16.msra.mxu0 0
    %776 = vmatprep.subr.bf16.mxu0 0
    %777 = vmatpush2.bf16.msra.mxu0 0
    %778 = vmatprep.subr.bf16.mxu0 0
    %779 = vmatpush2.bf16.msra.mxu0 0
    %780 = vmatprep.subr.bf16.mxu0 0
    %781 = vmatpush2.bf16.msra.mxu0 0
    %782 = vmatprep.subr.bf16.mxu0 0
    %783 = vmatpush2.bf16.msra.mxu0 0
    %784 = vmatprep.subr.bf16.mxu0 0
    %785 = vmatpush2.bf16.msra.mxu0 0
    %786 = vmatprep.mubr.bf16.mxu0 0
    %787 = vmatmul.mubr.bf16.gmra.mxu0 %v752
    %v788 = vpop.f32.mrf.mxu0
    %v789 = vadd.f32 0.0, %v788
    %v790 = vpop.f32.mrf.mxu0
    %v791 = vpop.f32.mrf.mxu0
    %v792 = vadd.f32 0.0, %v791
    %v793 = vpop.f32.mrf.mxu0
    %794 = vdwg.mxu0
    %795 = vrot.lane.b32.xlu0 %v155, 64
    %v796 = vpop.permute.xlu0 %795
    %v799 = vsel %vm563, %v741, 0
    %801 = vmatprep.subr.bf16.mxu0 0
    %802 = vmatpush1.bf16.msra.mxu0 0
    %803 = vmatprep.subr.bf16.mxu0 0
    %804 = vmatpush1.bf16.msra.mxu0 0
    %805 = vmatprep.subr.bf16.mxu0 0
    %806 = vmatpush1.bf16.msra.mxu0 0
    %807 = vmatprep.subr.bf16.mxu0 0
    %808 = vmatpush1.bf16.msra.mxu0 0
    %809 = vmatprep.subr.bf16.mxu0 0
    %810 = vmatpush1.bf16.msra.mxu0 0
    %811 = vmatprep.subr.bf16.mxu0 0
    %812 = vmatpush1.bf16.msra.mxu0 0
    %813 = vmatprep.subr.bf16.mxu0 0
    %814 = vmatpush1.bf16.msra.mxu0 0
    %815 = vmatprep.subr.bf16.mxu0 0
    %816 = vmatpush1.bf16.msra.mxu0 %v796
    %817 = vmatprep.subr.bf16.mxu0 0
    %818 = vmatpush2.bf16.msra.mxu0 0
    %819 = vmatprep.subr.bf16.mxu0 0
    %820 = vmatpush2.bf16.msra.mxu0 0
    %821 = vmatprep.subr.bf16.mxu0 0
    %822 = vmatpush2.bf16.msra.mxu0 0
    %823 = vmatprep.subr.bf16.mxu0 0
    %824 = vmatpush2.bf16.msra.mxu0 0
    %825 = vmatprep.subr.bf16.mxu0 0
    %826 = vmatpush2.bf16.msra.mxu0 0
    %827 = vmatprep.subr.bf16.mxu0 0
    %828 = vmatpush2.bf16.msra.mxu0 0
    %829 = vmatprep.subr.bf16.mxu0 0
    %830 = vmatpush2.bf16.msra.mxu0 0
    %831 = vmatprep.subr.bf16.mxu0 0
    %832 = vmatpush2.bf16.msra.mxu0 0
    %833 = vmatprep.mubr.bf16.mxu0 0
    %834 = vmatmul.mubr.bf16.gmra.mxu0 %v799
    %v835 = vpop.f32.mrf.mxu0
    %v836 = vadd.f32 0.0, %v835
    %v837 = vpop.f32.mrf.mxu0
    %v838 = vpop.f32.mrf.mxu0
    %v839 = vadd.f32 0.0, %v838
    %v840 = vpop.f32.mrf.mxu0
    %841 = vdwg.mxu0
    %842 = vrot.lane.b32.xlu0 %v154, 56
    %v843 = vpop.permute.xlu0 %842
    %v846 = vsel %vm563, %v742, 0
    %848 = vmatprep.subr.bf16.mxu0 0
    %849 = vmatpush1.bf16.msra.mxu0 0
    %850 = vmatprep.subr.bf16.mxu0 0
    %851 = vmatpush1.bf16.msra.mxu0 0
    %852 = vmatprep.subr.bf16.mxu0 0
    %853 = vmatpush1.bf16.msra.mxu0 0
    %854 = vmatprep.subr.bf16.mxu0 0
    %855 = vmatpush1.bf16.msra.mxu0 0
    %856 = vmatprep.subr.bf16.mxu0 0
    %857 = vmatpush1.bf16.msra.mxu0 0
    %858 = vmatprep.subr.bf16.mxu0 0
    %859 = vmatpush1.bf16.msra.mxu0 0
    %860 = vmatprep.subr.bf16.mxu0 0
    %861 = vmatpush1.bf16.msra.mxu0 0
    %862 = vmatprep.subr.bf16.mxu0 0
    %863 = vmatpush1.bf16.msra.mxu0 %v843
    %864 = vmatprep.subr.bf16.mxu0 0
    %865 = vmatpush2.bf16.msra.mxu0 0
    %866 = vmatprep.subr.bf16.mxu0 0
    %867 = vmatpush2.bf16.msra.mxu0 0
    %868 = vmatprep.subr.bf16.mxu0 0
    %869 = vmatpush2.bf16.msra.mxu0 0
    %870 = vmatprep.subr.bf16.mxu0 0
    %871 = vmatpush2.bf16.msra.mxu0 0
    %872 = vmatprep.subr.bf16.mxu0 0
    %873 = vmatpush2.bf16.msra.mxu0 0
    %874 = vmatprep.subr.bf16.mxu0 0
    %875 = vmatpush2.bf16.msra.mxu0 0
    %876 = vmatprep.subr.bf16.mxu0 0
    %877 = vmatpush2.bf16.msra.mxu0 0
    %878 = vmatprep.subr.bf16.mxu0 0
    %879 = vmatpush2.bf16.msra.mxu0 0
    %880 = vmatprep.mubr.bf16.mxu0 0
    %881 = vmatmul.mubr.bf16.gmra.mxu0 %v846
    %v882 = vpop.f32.mrf.mxu0
    %v883 = vadd.f32 0.0, %v882
    %v884 = vpop.f32.mrf.mxu0
    %v885 = vpop.f32.mrf.mxu0
    %v886 = vadd.f32 0.0, %v885
    %v887 = vpop.f32.mrf.mxu0
    %888 = vdwg.mxu0
    %889 = vrot.lane.b32.xlu0 %v155, 56
    %v890 = vpop.permute.xlu0 %889
    %v893 = vsel %vm563, %v743, 0
    %895 = vmatprep.subr.bf16.mxu0 0
    %896 = vmatpush1.bf16.msra.mxu0 0
    %897 = vmatprep.subr.bf16.mxu0 0
    %898 = vmatpush1.bf16.msra.mxu0 0
    %899 = vmatprep.subr.bf16.mxu0 0
    %900 = vmatpush1.bf16.msra.mxu0 0
    %901 = vmatprep.subr.bf16.mxu0 0
    %902 = vmatpush1.bf16.msra.mxu0 0
    %903 = vmatprep.subr.bf16.mxu0 0
    %904 = vmatpush1.bf16.msra.mxu0 0
    %905 = vmatprep.subr.bf16.mxu0 0
    %906 = vmatpush1.bf16.msra.mxu0 0
    %907 = vmatprep.subr.bf16.mxu0 0
    %908 = vmatpush1.bf16.msra.mxu0 0
    %909 = vmatprep.subr.bf16.mxu0 0
    %910 = vmatpush1.bf16.msra.mxu0 %v890
    %911 = vmatprep.subr.bf16.mxu0 0
    %912 = vmatpush2.bf16.msra.mxu0 0
    %913 = vmatprep.subr.bf16.mxu0 0
    %914 = vmatpush2.bf16.msra.mxu0 0
    %915 = vmatprep.subr.bf16.mxu0 0
    %916 = vmatpush2.bf16.msra.mxu0 0
    %917 = vmatprep.subr.bf16.mxu0 0
    %918 = vmatpush2.bf16.msra.mxu0 0
    %919 = vmatprep.subr.bf16.mxu0 0
    %920 = vmatpush2.bf16.msra.mxu0 0
    %921 = vmatprep.subr.bf16.mxu0 0
    %922 = vmatpush2.bf16.msra.mxu0 0
    %923 = vmatprep.subr.bf16.mxu0 0
    %924 = vmatpush2.bf16.msra.mxu0 0
    %925 = vmatprep.subr.bf16.mxu0 0
    %926 = vmatpush2.bf16.msra.mxu0 0
    %927 = vmatprep.mubr.bf16.mxu0 0
    %928 = vmatmul.mubr.bf16.gmra.mxu0 %v893
    %v929 = vpop.f32.mrf.mxu0
    %v930 = vadd.f32 0.0, %v929
    %v931 = vpop.f32.mrf.mxu0
    %v932 = vpop.f32.mrf.mxu0
    %v933 = vadd.f32 0.0, %v932
    %v934 = vpop.f32.mrf.mxu0
    %935 = vdwg.mxu0
    %936 = vrot.lane.b32.xlu0 %v154, 48
    %v937 = vpop.permute.xlu0 %936
    %v940 = vsel %vm563, %v744, 0
    %942 = vmatprep.subr.bf16.mxu0 0
    %943 = vmatpush1.bf16.msra.mxu0 0
    %944 = vmatprep.subr.bf16.mxu0 0
    %945 = vmatpush1.bf16.msra.mxu0 0
    %946 = vmatprep.subr.bf16.mxu0 0
    %947 = vmatpush1.bf16.msra.mxu0 0
    %948 = vmatprep.subr.bf16.mxu0 0
    %949 = vmatpush1.bf16.msra.mxu0 0
    %950 = vmatprep.subr.bf16.mxu0 0
    %951 = vmatpush1.bf16.msra.mxu0 0
    %952 = vmatprep.subr.bf16.mxu0 0
    %953 = vmatpush1.bf16.msra.mxu0 0
    %954 = vmatprep.subr.bf16.mxu0 0
    %955 = vmatpush1.bf16.msra.mxu0 0
    %956 = vmatprep.subr.bf16.mxu0 0
    %957 = vmatpush1.bf16.msra.mxu0 %v937
    %958 = vmatprep.subr.bf16.mxu0 0
    %959 = vmatpush2.bf16.msra.mxu0 0
    %960 = vmatprep.subr.bf16.mxu0 0
    %961 = vmatpush2.bf16.msra.mxu0 0
    %962 = vmatprep.subr.bf16.mxu0 0
    %963 = vmatpush2.bf16.msra.mxu0 0
    %964 = vmatprep.subr.bf16.mxu0 0
    %965 = vmatpush2.bf16.msra.mxu0 0
    %966 = vmatprep.subr.bf16.mxu0 0
    %967 = vmatpush2.bf16.msra.mxu0 0
    %968 = vmatprep.subr.bf16.mxu0 0
    %969 = vmatpush2.bf16.msra.mxu0 0
    %970 = vmatprep.subr.bf16.mxu0 0
    %971 = vmatpush2.bf16.msra.mxu0 0
    %972 = vmatprep.subr.bf16.mxu0 0
    %973 = vmatpush2.bf16.msra.mxu0 0
    %974 = vmatprep.mubr.bf16.mxu0 0
    %975 = vmatmul.mubr.bf16.gmra.mxu0 %v940
    %v976 = vpop.f32.mrf.mxu0
    %v977 = vadd.f32 0.0, %v976
    %v978 = vpop.f32.mrf.mxu0
    %v979 = vpop.f32.mrf.mxu0
    %v980 = vadd.f32 0.0, %v979
    %v981 = vpop.f32.mrf.mxu0
    %982 = vdwg.mxu0
    %983 = vrot.lane.b32.xlu0 %v155, 48
    %v984 = vpop.permute.xlu0 %983
    %v987 = vsel %vm563, %v745, 0
    %989 = vmatprep.subr.bf16.mxu0 0
    %990 = vmatpush1.bf16.msra.mxu0 0
    %991 = vmatprep.subr.bf16.mxu0 0
    %992 = vmatpush1.bf16.msra.mxu0 0
    %993 = vmatprep.subr.bf16.mxu0 0
    %994 = vmatpush1.bf16.msra.mxu0 0
    %995 = vmatprep.subr.bf16.mxu0 0
    %996 = vmatpush1.bf16.msra.mxu0 0
    %997 = vmatprep.subr.bf16.mxu0 0
    %998 = vmatpush1.bf16.msra.mxu0 0
    %999 = vmatprep.subr.bf16.mxu0 0
    %1000 = vmatpush1.bf16.msra.mxu0 0
    %1001 = vmatprep.subr.bf16.mxu0 0
    %1002 = vmatpush1.bf16.msra.mxu0 0
    %1003 = vmatprep.subr.bf16.mxu0 0
    %1004 = vmatpush1.bf16.msra.mxu0 %v984
    %1005 = vmatprep.subr.bf16.mxu0 0
    %1006 = vmatpush2.bf16.msra.mxu0 0
    %1007 = vmatprep.subr.bf16.mxu0 0
    %1008 = vmatpush2.bf16.msra.mxu0 0
    %1009 = vmatprep.subr.bf16.mxu0 0
    %1010 = vmatpush2.bf16.msra.mxu0 0
    %1011 = vmatprep.subr.bf16.mxu0 0
    %1012 = vmatpush2.bf16.msra.mxu0 0
    %1013 = vmatprep.subr.bf16.mxu0 0
    %1014 = vmatpush2.bf16.msra.mxu0 0
    %1015 = vmatprep.subr.bf16.mxu0 0
    %1016 = vmatpush2.bf16.msra.mxu0 0
    %1017 = vmatprep.subr.bf16.mxu0 0
    %1018 = vmatpush2.bf16.msra.mxu0 0
    %1019 = vmatprep.subr.bf16.mxu0 0
    %1020 = vmatpush2.bf16.msra.mxu0 0
    %1021 = vmatprep.mubr.bf16.mxu0 0
    %1022 = vmatmul.mubr.bf16.gmra.mxu0 %v987
    %v1023 = vpop.f32.mrf.mxu0
    %v1024 = vadd.f32 0.0, %v1023
    %v1025 = vpop.f32.mrf.mxu0
    %v1026 = vpop.f32.mrf.mxu0
    %v1027 = vadd.f32 0.0, %v1026
    %v1028 = vpop.f32.mrf.mxu0
    %1029 = vdwg.mxu0
    %1030 = vrot.lane.b32.xlu0 %v154, 40
    %v1031 = vpop.permute.xlu0 %1030
    %v1034 = vsel %vm563, %v746, 0
    %1036 = vmatprep.subr.bf16.mxu0 0
    %1037 = vmatpush1.bf16.msra.mxu0 0
    %1038 = vmatprep.subr.bf16.mxu0 0
    %1039 = vmatpush1.bf16.msra.mxu0 0
    %1040 = vmatprep.subr.bf16.mxu0 0
    %1041 = vmatpush1.bf16.msra.mxu0 0
    %1042 = vmatprep.subr.bf16.mxu0 0
    %1043 = vmatpush1.bf16.msra.mxu0 0
    %1044 = vmatprep.subr.bf16.mxu0 0
    %1045 = vmatpush1.bf16.msra.mxu0 0
    %1046 = vmatprep.subr.bf16.mxu0 0
    %1047 = vmatpush1.bf16.msra.mxu0 0
    %1048 = vmatprep.subr.bf16.mxu0 0
    %1049 = vmatpush1.bf16.msra.mxu0 0
    %1050 = vmatprep.subr.bf16.mxu0 0
    %1051 = vmatpush1.bf16.msra.mxu0 %v1031
    %1052 = vmatprep.subr.bf16.mxu0 0
    %1053 = vmatpush2.bf16.msra.mxu0 0
    %1054 = vmatprep.subr.bf16.mxu0 0
    %1055 = vmatpush2.bf16.msra.mxu0 0
    %1056 = vmatprep.subr.bf16.mxu0 0
    %1057 = vmatpush2.bf16.msra.mxu0 0
    %1058 = vmatprep.subr.bf16.mxu0 0
    %1059 = vmatpush2.bf16.msra.mxu0 0
    %1060 = vmatprep.subr.bf16.mxu0 0
    %1061 = vmatpush2.bf16.msra.mxu0 0
    %1062 = vmatprep.subr.bf16.mxu0 0
    %1063 = vmatpush2.bf16.msra.mxu0 0
    %1064 = vmatprep.subr.bf16.mxu0 0
    %1065 = vmatpush2.bf16.msra.mxu0 0
    %1066 = vmatprep.subr.bf16.mxu0 0
    %1067 = vmatpush2.bf16.msra.mxu0 0
    %1068 = vmatprep.mubr.bf16.mxu0 0
    %1069 = vmatmul.mubr.bf16.gmra.mxu0 %v1034
    %v1070 = vpop.f32.mrf.mxu0
    %v1071 = vadd.f32 0.0, %v1070
    %v1072 = vpop.f32.mrf.mxu0
    %v1073 = vpop.f32.mrf.mxu0
    %v1074 = vadd.f32 0.0, %v1073
    %v1075 = vpop.f32.mrf.mxu0
    %1076 = vdwg.mxu0
    %1077 = vrot.lane.b32.xlu0 %v155, 40
    %v1078 = vpop.permute.xlu0 %1077
    %v1081 = vsel %vm563, %v747, 0
    %1083 = vmatprep.subr.bf16.mxu0 0
    %1084 = vmatpush1.bf16.msra.mxu0 0
    %1085 = vmatprep.subr.bf16.mxu0 0
    %1086 = vmatpush1.bf16.msra.mxu0 0
    %1087 = vmatprep.subr.bf16.mxu0 0
    %1088 = vmatpush1.bf16.msra.mxu0 0
    %1089 = vmatprep.subr.bf16.mxu0 0
    %1090 = vmatpush1.bf16.msra.mxu0 0
    %1091 = vmatprep.subr.bf16.mxu0 0
    %1092 = vmatpush1.bf16.msra.mxu0 0
    %1093 = vmatprep.subr.bf16.mxu0 0
    %1094 = vmatpush1.bf16.msra.mxu0 0
    %1095 = vmatprep.subr.bf16.mxu0 0
    %1096 = vmatpush1.bf16.msra.mxu0 0
    %1097 = vmatprep.subr.bf16.mxu0 0
    %1098 = vmatpush1.bf16.msra.mxu0 %v1078
    %1099 = vmatprep.subr.bf16.mxu0 0
    %1100 = vmatpush2.bf16.msra.mxu0 0
    %1101 = vmatprep.subr.bf16.mxu0 0
    %1102 = vmatpush2.bf16.msra.mxu0 0
    %1103 = vmatprep.subr.bf16.mxu0 0
    %1104 = vmatpush2.bf16.msra.mxu0 0
    %1105 = vmatprep.subr.bf16.mxu0 0
    %1106 = vmatpush2.bf16.msra.mxu0 0
    %1107 = vmatprep.subr.bf16.mxu0 0
    %1108 = vmatpush2.bf16.msra.mxu0 0
    %1109 = vmatprep.subr.bf16.mxu0 0
    %1110 = vmatpush2.bf16.msra.mxu0 0
    %1111 = vmatprep.subr.bf16.mxu0 0
    %1112 = vmatpush2.bf16.msra.mxu0 0
    %1113 = vmatprep.subr.bf16.mxu0 0
    %1114 = vmatpush2.bf16.msra.mxu0 0
    %1115 = vmatprep.mubr.bf16.mxu0 0
    %1116 = vmatmul.mubr.bf16.gmra.mxu0 %v1081
    %v1117 = vpop.f32.mrf.mxu0
    %v1118 = vadd.f32 0.0, %v1117
    %v1119 = vpop.f32.mrf.mxu0
    %v1120 = vpop.f32.mrf.mxu0
    %v1121 = vadd.f32 0.0, %v1120
    %v1122 = vpop.f32.mrf.mxu0
    %1123 = vdwg.mxu0
    %1128 = vrot.lane.b32.xlu0 %v883, 8
    %v1129 = vpop.permute.xlu0 %1128
    %1130 = vrot.lane.b32.xlu0 %v886, 8
    %v1131 = vpop.permute.xlu0 %1130
    %1132 = vrot.lane.b32.xlu0 %v930, 8
    %v1133 = vpop.permute.xlu0 %1132
    %1134 = vrot.lane.b32.xlu0 %v933, 8
    %v1135 = vpop.permute.xlu0 %1134
    %1144 = vrot.lane.b32.xlu0 %v977, 16
    %v1145 = vpop.permute.xlu0 %1144
    %1146 = vrot.lane.b32.xlu0 %v980, 16
    %v1147 = vpop.permute.xlu0 %1146
    %1148 = vrot.lane.b32.xlu0 %v1024, 16
    %v1149 = vpop.permute.xlu0 %1148
    %1150 = vrot.lane.b32.xlu0 %v1027, 16
    %v1151 = vpop.permute.xlu0 %1150
    %1160 = vrot.lane.b32.xlu0 %v1071, 24
    %v1161 = vpop.permute.xlu0 %1160
    %1162 = vrot.lane.b32.xlu0 %v1074, 24
    %v1163 = vpop.permute.xlu0 %1162
    %1164 = vrot.lane.b32.xlu0 %v1118, 24
    %v1165 = vpop.permute.xlu0 %1164
    %1166 = vrot.lane.b32.xlu0 %v1121, 24
    %v1167 = vpop.permute.xlu0 %1166
    %v1172 = vsel %vm159, %v789, %v1129
    %v1173 = vsel %vm159, %v792, %v1131
    %v1174 = vsel %vm159, %v836, %v1133
    %v1175 = vsel %vm159, %v839, %v1135
    %v1176 = vsel %vm563, %v1172, %v1145
    %v1177 = vsel %vm563, %v1173, %v1147
    %v1178 = vsel %vm563, %v1174, %v1149
    %v1179 = vsel %vm563, %v1175, %v1151
    %vm1180 = vcmask 195584
    %v1181 = vsel %vm1180, %v1176, %v1161
    %v1182 = vsel %vm1180, %v1177, %v1163
    %v1183 = vsel %vm1180, %v1178, %v1165
    %v1184 = vsel %vm1180, %v1179, %v1167
    %v1185 = vpack.c.bf16 %v1182, %v1181
    %v1186 = vpack.c.bf16 %v1184, %v1183
    %v1191 = vunpack.c.l.b16 %v63
    %v1192 = vunpack.c.l.b16 %v64
    %v1193 = vunpack.c.l.b16 %v65
    %v1194 = vunpack.c.l.b16 %v66
    %v1195 = vpack.c.b16 %v1192, %v1191
    %v1196 = vpack.c.b16 %v1194, %v1193
    %v1200 = vsel %vm98, %v1185, 0
    %v1203 = vsel %vm98, %v1186, 0
    %1205 = vmatprep.subr.bf16.mxu0 0
    %1206 = vmatpush1.bf16.msra.mxu0 0
    %1207 = vmatprep.subr.bf16.mxu0 0
    %1208 = vmatpush1.bf16.msra.mxu0 0
    %1209 = vmatprep.subr.bf16.mxu0 0
    %1210 = vmatpush1.bf16.msra.mxu0 0
    %1211 = vmatprep.subr.bf16.mxu0 0
    %1212 = vmatpush1.bf16.msra.mxu0 0
    %1213 = vmatprep.subr.bf16.mxu0 0
    %1214 = vmatpush1.bf16.msra.mxu0 0
    %1215 = vmatprep.subr.bf16.mxu0 0
    %1216 = vmatpush1.bf16.msra.mxu0 0
    %1217 = vmatprep.subr.bf16.mxu0 0
    %1218 = vmatpush1.bf16.msra.mxu0 %v1196
    %1219 = vmatprep.subr.bf16.mxu0 0
    %1220 = vmatpush1.bf16.msra.mxu0 %v1195
    %1221 = vmatprep.subr.bf16.mxu0 0
    %1222 = vmatpush2.bf16.msra.mxu0 0
    %1223 = vmatprep.subr.bf16.mxu0 0
    %1224 = vmatpush2.bf16.msra.mxu0 0
    %1225 = vmatprep.subr.bf16.mxu0 0
    %1226 = vmatpush2.bf16.msra.mxu0 0
    %1227 = vmatprep.subr.bf16.mxu0 0
    %1228 = vmatpush2.bf16.msra.mxu0 0
    %1229 = vmatprep.subr.bf16.mxu0 0
    %1230 = vmatpush2.bf16.msra.mxu0 0
    %1231 = vmatprep.subr.bf16.mxu0 0
    %1232 = vmatpush2.bf16.msra.mxu0 0
    %1233 = vmatprep.subr.bf16.mxu0 0
    %1234 = vmatpush2.bf16.msra.mxu0 0
    %1235 = vmatprep.subr.bf16.mxu0 0
    %1236 = vmatpush2.bf16.msra.mxu0 0
    %1237 = vmatprep.mubr.bf16.mxu0 0
    %1238 = vmatmul.mubr.bf16.gmra.mxu0 %v1200
    %v1239 = vpop.f32.mrf.mxu0
    %v1240 = vadd.f32 0.0, %v1239
    %v1241 = vpop.f32.mrf.mxu0
    %v1242 = vpop.f32.mrf.mxu0
    %v1243 = vadd.f32 0.0, %v1242
    %v1244 = vpop.f32.mrf.mxu0
    %1245 = vmatprep.mubr.bf16.mxu0 0
    %1246 = vmatmul.mubr.bf16.gmra.mxu0 %v1203
    %v1247 = vpop.f32.mrf.mxu0
    %v1248 = vadd.f32 0.0, %v1247
    %v1249 = vpop.f32.mrf.mxu0
    %v1250 = vpop.f32.mrf.mxu0
    %v1251 = vadd.f32 0.0, %v1250
    %v1252 = vpop.f32.mrf.mxu0
    %1253 = vdwg.mxu0
    %v1254 = vadd.f32 %v55, %v1240
    %v1255 = vadd.f32 %v56, %v1243
    %v1256 = vadd.f32 %v57, %v1248
    %v1257 = vadd.f32 %v58, %v1251
    %v1258 = vlaneseq
    %v1259 = vshrl.u32 %v1258, 7
    %v1260 = vsub.s32 1, %v1259
    %v1261 = vrot.slane %v79, %v1260
    %v1262 = vadd.f32 %v1254, %v1261
    %v1263 = vadd.f32 %v1255, %v1261
    %v1264 = vadd.f32 %v1256, %v1261
    %v1265 = vadd.f32 %v1257, %v1261
    %v1266 = vsel %vm98, %v1262, 0.0
    %v1267 = vsel %vm98, %v1263, 0.0
    %v1268 = vadd.f32 %v1266, %v1267
    %v1269 = vsel %vm98, %v1264, 0.0
    %v1270 = vadd.f32 %v1268, %v1269
    %v1271 = vsel %vm98, %v1265, 0.0
    %v1272 = vadd.f32 %v1270, %v1271
    %v1273 = vrot.slane %v1272, 4
    %v1274 = vadd.f32 %v1272, %v1273
    %v1275 = vrot.slane %v1274, 2
    %v1276 = vadd.f32 %v1274, %v1275
    %v1277 = vrot.slane %v1276, 1
    %v1278 = vadd.f32 %v1276, %v1277
    %v1279 = vmul.f32 %v1278, 0.03125
    %v1280 = vsub.f32 %v1262, %v1279
    %v1281 = vsub.f32 %v1263, %v1279
    %v1282 = vsub.f32 %v1264, %v1279
    %v1283 = vsub.f32 %v1265, %v1279
    %v1284 = vmul.f32 %v1280, %v1280
    %v1285 = vmul.f32 %v1281, %v1281
    %v1286 = vmul.f32 %v1282, %v1282
    %v1287 = vmul.f32 %v1283, %v1283
    %v1288 = vsel %vm98, %v1284, 0.0
    %v1289 = vsel %vm98, %v1285, 0.0
    %v1290 = vadd.f32 %v1288, %v1289
    %v1291 = vsel %vm98, %v1286, 0.0
    %v1292 = vadd.f32 %v1290, %v1291
    %v1293 = vsel %vm98, %v1287, 0.0
    %v1294 = vadd.f32 %v1292, %v1293
    %v1295 = vrot.slane %v1294, 4
    %v1296 = vadd.f32 %v1294, %v1295
    %v1297 = vrot.slane %v1296, 2
    %v1298 = vadd.f32 %v1296, %v1297
    %v1299 = vrot.slane %v1298, 1
    %v1300 = vadd.f32 %v1298, %v1299
    %v1301 = vmul.f32 %v1300, 0.03125
    %v1302 = vadd.f32 %v1301, 1e-05
    %v1303 = vrsqrt.pop %v1302
    %v1304 = vmul.f32 %v1303, %v79
    %v1305 = vlaneseq
    %v1306 = vshrl.u32 %v1305, 7
    %v1307 = vsub.s32 2, %v1306
    %v1308 = vrot.slane %v1304, %v1307
    %v1309 = vmul.f32 %v1280, %v1308
    %v1310 = vmul.f32 %v1281, %v1308
    %v1311 = vmul.f32 %v1282, %v1308
    %v1312 = vmul.f32 %v1283, %v1308
    %v1313 = vlaneseq
    %v1314 = vshrl.u32 %v1313, 7
    %v1315 = vsub.s32 3, %v1314
    %v1316 = vrot.slane %v79, %v1315
    %v1317 = vadd.f32 %v1309, %v1316
    %v1318 = vadd.f32 %v1310, %v1316
    %v1319 = vadd.f32 %v1311, %v1316
    %v1320 = vadd.f32 %v1312, %v1316
    %v1321 = vpack.c.bf16 %v1318, %v1317
    %v1322 = vpack.c.bf16 %v1320, %v1319
    %v1323 = vlaneseq
    %v1324 = vshrl.u32 %v1323, 7
    %v1325 = vsub.s32 4, %v1324
    %v1326 = vrot.slane %v79, %v1325
    %v1331 = vunpack.c.l.b16 %v67
    %v1332 = vunpack.c.l.b16 %v68
    %v1333 = vunpack.c.l.b16 %v69
    %v1334 = vunpack.c.l.b16 %v70
    %v1335 = vpack.c.b16 %v1332, %v1331
    %v1336 = vpack.c.b16 %v1334, %v1333
    %v1340 = vsel %vm98, %v1321, 0
    %v1343 = vsel %vm98, %v1322, 0
    %1345 = vmatprep.subr.bf16.mxu0 0
    %1346 = vmatpush1.bf16.msra.mxu0 0
    %1347 = vmatprep.subr.bf16.mxu0 0
    %1348 = vmatpush1.bf16.msra.mxu0 0
    %1349 = vmatprep.subr.bf16.mxu0 0
    %1350 = vmatpush1.bf16.msra.mxu0 0
    %1351 = vmatprep.subr.bf16.mxu0 0
    %1352 = vmatpush1.bf16.msra.mxu0 0
    %1353 = vmatprep.subr.bf16.mxu0 0
    %1354 = vmatpush1.bf16.msra.mxu0 0
    %1355 = vmatprep.subr.bf16.mxu0 0
    %1356 = vmatpush1.bf16.msra.mxu0 0
    %1357 = vmatprep.subr.bf16.mxu0 0
    %1358 = vmatpush1.bf16.msra.mxu0 %v1336
    %1359 = vmatprep.subr.bf16.mxu0 0
    %1360 = vmatpush1.bf16.msra.mxu0 %v1335
    %1361 = vmatprep.subr.bf16.mxu0 0
    %1362 = vmatpush2.bf16.msra.mxu0 0
    %1363 = vmatprep.subr.bf16.mxu0 0
    %1364 = vmatpush2.bf16.msra.mxu0 0
    %1365 = vmatprep.subr.bf16.mxu0 0
    %1366 = vmatpush2.bf16.msra.mxu0 0
    %1367 = vmatprep.subr.bf16.mxu0 0
    %1368 = vmatpush2.bf16.msra.mxu0 0
    %1369 = vmatprep.subr.bf16.mxu0 0
    %1370 = vmatpush2.bf16.msra.mxu0 0
    %1371 = vmatprep.subr.bf16.mxu0 0
    %1372 = vmatpush2.bf16.msra.mxu0 0
    %1373 = vmatprep.subr.bf16.mxu0 0
    %1374 = vmatpush2.bf16.msra.mxu0 0
    %1375 = vmatprep.subr.bf16.mxu0 0
    %1376 = vmatpush2.bf16.msra.mxu0 0
    %1377 = vmatprep.mubr.bf16.mxu0 0
    %1378 = vmatmul.mubr.bf16.gmra.mxu0 %v1340
    %v1379 = vpop.f32.mrf.mxu0
    %v1380 = vadd.f32 %v1326, %v1379
    %v1381 = vpop.f32.mrf.mxu0
    %v1382 = vpop.f32.mrf.mxu0
    %v1383 = vadd.f32 %v1326, %v1382
    %v1384 = vpop.f32.mrf.mxu0
    %1385 = vmatprep.mubr.bf16.mxu0 0
    %1386 = vmatmul.mubr.bf16.gmra.mxu0 %v1343
    %v1387 = vpop.f32.mrf.mxu0
    %v1388 = vadd.f32 %v1326, %v1387
    %v1389 = vpop.f32.mrf.mxu0
    %v1390 = vpop.f32.mrf.mxu0
    %v1391 = vadd.f32 %v1326, %v1390
    %v1392 = vpop.f32.mrf.mxu0
    %1393 = vdwg.mxu0
    %v1394 = vmul.f32 %v1380, 0.5
    %v1395 = vmul.f32 %v1383, 0.5
    %v1396 = vmul.f32 %v1388, 0.5
    %v1397 = vmul.f32 %v1391, 0.5
    %v1398 = vmul.f32 %v1380, 0.70710677
    %v1399 = vmul.f32 %v1383, 0.70710677
    %v1400 = vmul.f32 %v1388, 0.70710677
    %v1401 = vmul.f32 %v1391, 0.70710677
    %v1402 = vand.u32 2147483647, %v1398
    %v1403 = vand.u32 2147483647, %v1399
    %v1404 = vand.u32 2147483647, %v1400
    %v1405 = vand.u32 2147483647, %v1401
    %v1406 = vmul.f32 %v1402, 0.3275911
    %v1407 = vmul.f32 %v1403, 0.3275911
    %v1408 = vmul.f32 %v1404, 0.3275911
    %v1409 = vmul.f32 %v1405, 0.3275911
    %v1410 = vadd.f32 %v1406, 1.0
    %v1411 = vadd.f32 %v1407, 1.0
    %v1412 = vadd.f32 %v1408, 1.0
    %v1413 = vadd.f32 %v1409, 1.0
    %v1414 = vrcp.pop %v1410
    %v1415 = vrcp.pop %v1411
    %v1416 = vrcp.pop %v1412
    %v1417 = vrcp.pop %v1413
    %v1418 = vmul.f32 %v1414, 1.0614054
    %v1419 = vmul.f32 %v1415, 1.0614054
    %v1420 = vmul.f32 %v1416, 1.0614054
    %v1421 = vmul.f32 %v1417, 1.0614054
    %v1422 = vadd.f32 %v1418, -1.4531521
    %v1423 = vadd.f32 %v1419, -1.4531521
    %v1424 = vadd.f32 %v1420, -1.4531521
    %v1425 = vadd.f32 %v1421, -1.4531521
    %v1426 = vmul.f32 %v1422, %v1414
    %v1427 = vmul.f32 %v1423, %v1415
    %v1428 = vmul.f32 %v1424, %v1416
    %v1429 = vmul.f32 %v1425, %v1417
    %v1430 = vadd.f32 %v1426, 1.4214138
    %v1431 = vadd.f32 %v1427, 1.4214138
    %v1432 = vadd.f32 %v1428, 1.4214138
    %v1433 = vadd.f32 %v1429, 1.4214138
    %v1434 = vmul.f32 %v1430, %v1414
    %v1435 = vmul.f32 %v1431, %v1415
    %v1436 = vmul.f32 %v1432, %v1416
    %v1437 = vmul.f32 %v1433, %v1417
    %v1438 = vadd.f32 %v1434, -0.28449672
    %v1439 = vadd.f32 %v1435, -0.28449672
    %v1440 = vadd.f32 %v1436, -0.28449672
    %v1441 = vadd.f32 %v1437, -0.28449672
    %v1442 = vmul.f32 %v1438, %v1414
    %v1443 = vmul.f32 %v1439, %v1415
    %v1444 = vmul.f32 %v1440, %v1416
    %v1445 = vmul.f32 %v1441, %v1417
    %v1446 = vadd.f32 %v1442, 0.2548296
    %v1447 = vadd.f32 %v1443, 0.2548296
    %v1448 = vadd.f32 %v1444, 0.2548296
    %v1449 = vadd.f32 %v1445, 0.2548296
    %v1450 = vmul.f32 %v1446, %v1414
    %v1451 = vmul.f32 %v1447, %v1415
    %v1452 = vmul.f32 %v1448, %v1416
    %v1453 = vmul.f32 %v1449, %v1417
    %v1454 = vsub.f32 0.0, %v1402
    %v1455 = vsub.f32 0.0, %v1403
    %v1456 = vsub.f32 0.0, %v1404
    %v1457 = vsub.f32 0.0, %v1405
    %v1458 = vmul.f32 %v1454, %v1402
    %v1459 = vmul.f32 %v1455, %v1403
    %v1460 = vmul.f32 %v1456, %v1404
    %v1461 = vmul.f32 %v1457, %v1405
    %v1462 = vmul.f32 %v1458, 1.442695
    %v1463 = vpow.pop %v1462
    %v1464 = vmul.f32 %v1459, 1.442695
    %v1465 = vpow.pop %v1464
    %v1466 = vmul.f32 %v1460, 1.442695
    %v1467 = vpow.pop %v1466
    %v1468 = vmul.f32 %v1461, 1.442695
    %v1469 = vpow.pop %v1468
    %v1470 = vmul.f32 %v1450, %v1463
    %v1471 = vmul.f32 %v1451, %v1465
    %v1472 = vmul.f32 %v1452, %v1467
    %v1473 = vmul.f32 %v1453, %v1469
    %v1474 = vsub.f32 1.0, %v1470
    %v1475 = vsub.f32 1.0, %v1471
    %v1476 = vsub.f32 1.0, %v1472
    %v1477 = vsub.f32 1.0, %v1473
    %vm1478 = vcmp.lt.f32.partialorder %v1398, 0.0
    %vm1479 = vcmp.lt.f32.partialorder %v1399, 0.0
    %vm1480 = vcmp.lt.f32.partialorder %v1400, 0.0
    %vm1481 = vcmp.lt.f32.partialorder %v1401, 0.0
    %v1482 = vsub.f32 0.0, %v1474
    %v1483 = vsub.f32 0.0, %v1475
    %v1484 = vsub.f32 0.0, %v1476
    %v1485 = vsub.f32 0.0, %v1477
    %v1486 = vsel %vm1478, %v1482, %v1474
    %v1487 = vsel %vm1479, %v1483, %v1475
    %v1488 = vsel %vm1480, %v1484, %v1476
    %v1489 = vsel %vm1481, %v1485, %v1477
    %v1490 = vadd.f32 %v1486, 1.0
    %v1491 = vadd.f32 %v1487, 1.0
    %v1492 = vadd.f32 %v1488, 1.0
    %v1493 = vadd.f32 %v1489, 1.0
    %v1494 = vmul.f32 %v1394, %v1490
    %v1495 = vmul.f32 %v1395, %v1491
    %v1496 = vmul.f32 %v1396, %v1492
    %v1497 = vmul.f32 %v1397, %v1493
    %v1498 = vpack.c.bf16 %v1495, %v1494
    %v1499 = vpack.c.bf16 %v1497, %v1496
    %v1500 = vlaneseq
    %v1501 = vshrl.u32 %v1500, 7
    %v1502 = vsub.s32 5, %v1501
    %v1503 = vrot.slane %v79, %v1502
    %v1512 = vunpack.c.l.b16 %v71
    %v1513 = vunpack.c.l.b16 %v72
    %v1514 = vunpack.c.l.b16 %v73
    %v1515 = vunpack.c.l.b16 %v74
    %v1516 = vunpack.c.l.b16 %v75
    %v1517 = vunpack.c.l.b16 %v76
    %v1518 = vunpack.c.l.b16 %v77
    %v1519 = vunpack.c.l.b16 %v78
    %v1520 = vpack.c.b16 %v1513, %v1512
    %v1521 = vpack.c.b16 %v1515, %v1514
    %v1522 = vpack.c.b16 %v1517, %v1516
    %v1523 = vpack.c.b16 %v1519, %v1518
    %vm1528 = vcmask 523264
    %v1530 = vsel %vm1528, %v1498, 0
    %v1533 = vsel %vm1528, %v1499, 0
    %1535 = vmatprep.subr.bf16.mxu0 0
    %1536 = vmatpush1.bf16.msra.mxu0 0
    %1537 = vmatprep.subr.bf16.mxu0 0
    %1538 = vmatpush1.bf16.msra.mxu0 0
    %1539 = vmatprep.subr.bf16.mxu0 0
    %1540 = vmatpush1.bf16.msra.mxu0 0
    %1541 = vmatprep.subr.bf16.mxu0 0
    %1542 = vmatpush1.bf16.msra.mxu0 0
    %1543 = vmatprep.subr.bf16.mxu0 0
    %1544 = vmatpush1.bf16.msra.mxu0 %v1523
    %1545 = vmatprep.subr.bf16.mxu0 0
    %1546 = vmatpush1.bf16.msra.mxu0 %v1522
    %1547 = vmatprep.subr.bf16.mxu0 0
    %1548 = vmatpush1.bf16.msra.mxu0 %v1521
    %1549 = vmatprep.subr.bf16.mxu0 0
    %1550 = vmatpush1.bf16.msra.mxu0 %v1520
    %1551 = vmatprep.subr.bf16.mxu0 0
    %1552 = vmatpush2.bf16.msra.mxu0 0
    %1553 = vmatprep.subr.bf16.mxu0 0
    %1554 = vmatpush2.bf16.msra.mxu0 0
    %1555 = vmatprep.subr.bf16.mxu0 0
    %1556 = vmatpush2.bf16.msra.mxu0 0
    %1557 = vmatprep.subr.bf16.mxu0 0
    %1558 = vmatpush2.bf16.msra.mxu0 0
    %1559 = vmatprep.subr.bf16.mxu0 0
    %1560 = vmatpush2.bf16.msra.mxu0 0
    %1561 = vmatprep.subr.bf16.mxu0 0
    %1562 = vmatpush2.bf16.msra.mxu0 0
    %1563 = vmatprep.subr.bf16.mxu0 0
    %1564 = vmatpush2.bf16.msra.mxu0 0
    %1565 = vmatprep.subr.bf16.mxu0 0
    %1566 = vmatpush2.bf16.msra.mxu0 0
    %1567 = vmatprep.mubr.bf16.mxu0 0
    %1568 = vmatmul.mubr.bf16.gmra.mxu0 %v1530
    %v1569 = vpop.f32.mrf.mxu0
    %v1570 = vadd.f32 %v1503, %v1569
    %v1571 = vpop.f32.mrf.mxu0
    %v1572 = vpop.f32.mrf.mxu0
    %v1573 = vadd.f32 %v1503, %v1572
    %v1574 = vpop.f32.mrf.mxu0
    %1575 = vmatprep.mubr.bf16.mxu0 0
    %1576 = vmatmul.mubr.bf16.gmra.mxu0 %v1533
    %v1577 = vpop.f32.mrf.mxu0
    %v1578 = vadd.f32 %v1503, %v1577
    %v1579 = vpop.f32.mrf.mxu0
    %v1580 = vpop.f32.mrf.mxu0
    %v1581 = vadd.f32 %v1503, %v1580
    %v1582 = vpop.f32.mrf.mxu0
    %1583 = vdwg.mxu0
    %v1584 = vadd.f32 %v1317, %v1570
    %v1585 = vadd.f32 %v1318, %v1573
    %v1586 = vadd.f32 %v1319, %v1578
    %v1587 = vadd.f32 %v1320, %v1581
    %v1588 = vsel %vm98, %v1584, 0.0
    %v1589 = vsel %vm98, %v1585, 0.0
    %v1590 = vadd.f32 %v1588, %v1589
    %v1591 = vsel %vm98, %v1586, 0.0
    %v1592 = vadd.f32 %v1590, %v1591
    %v1593 = vsel %vm98, %v1587, 0.0
    %v1594 = vadd.f32 %v1592, %v1593
    %v1595 = vrot.slane %v1594, 4
    %v1596 = vadd.f32 %v1594, %v1595
    %v1597 = vrot.slane %v1596, 2
    %v1598 = vadd.f32 %v1596, %v1597
    %v1599 = vrot.slane %v1598, 1
    %v1600 = vadd.f32 %v1598, %v1599
    %v1601 = vmul.f32 %v1600, 0.03125
    %v1602 = vsub.f32 %v1584, %v1601
    %v1603 = vsub.f32 %v1585, %v1601
    %v1604 = vsub.f32 %v1586, %v1601
    %v1605 = vsub.f32 %v1587, %v1601
    %v1606 = vmul.f32 %v1602, %v1602
    %v1607 = vmul.f32 %v1603, %v1603
    %v1608 = vmul.f32 %v1604, %v1604
    %v1609 = vmul.f32 %v1605, %v1605
    %v1610 = vsel %vm98, %v1606, 0.0
    %v1611 = vsel %vm98, %v1607, 0.0
    %v1612 = vadd.f32 %v1610, %v1611
    %v1613 = vsel %vm98, %v1608, 0.0
    %v1614 = vadd.f32 %v1612, %v1613
    %v1615 = vsel %vm98, %v1609, 0.0
    %v1616 = vadd.f32 %v1614, %v1615
    %v1617 = vrot.slane %v1616, 4
    %v1618 = vadd.f32 %v1616, %v1617
    %v1619 = vrot.slane %v1618, 2
    %v1620 = vadd.f32 %v1618, %v1619
    %v1621 = vrot.slane %v1620, 1
    %v1622 = vadd.f32 %v1620, %v1621
    %v1623 = vmul.f32 %v1622, 0.03125
    %v1624 = vadd.f32 %v1623, 1e-05
    %v1625 = vrsqrt.pop %v1624
    %v1626 = vmul.f32 %v1625, %v79
    %v1627 = vlaneseq
    %v1628 = vshrl.u32 %v1627, 7
    %v1629 = vsub.s32 6, %v1628
    %v1630 = vrot.slane %v1626, %v1629
    %v1631 = vmul.f32 %v1602, %v1630
    %v1632 = vmul.f32 %v1603, %v1630
    %v1633 = vmul.f32 %v1604, %v1630
    %v1634 = vmul.f32 %v1605, %v1630
    %v1635 = vlaneseq
    %v1636 = vshrl.u32 %v1635, 7
    %v1637 = vsub.s32 7, %v1636
    %v1638 = vrot.slane %v79, %v1637
    %v1639 = vadd.f32 %v1631, %v1638
    %v1640 = vadd.f32 %v1632, %v1638
    %v1641 = vadd.f32 %v1633, %v1638
    %v1642 = vadd.f32 %v1634, %v1638
    %1643 = vst.msk [vmem:[#allocation8] sm:$0xff] %vm98, %v1639
    %1644 = vst.msk [vmem:[#allocation8 + $0x8] sm:$0xff] %vm98, %v1640
    %1645 = vst.msk [vmem:[#allocation8 + $0x10] sm:$0xff] %vm98, %v1641
    %1646 = vst.msk [vmem:[#allocation8 + $0x18] sm:$0xff] %vm98, %v1642
    // Predicated region
    $region26: #{tst_encoder_layer.1} parent=1 // pred_check
      _
    $region27: #{tst_encoder_layer.1} parent=1 // pred_check_branch
      %1648 = sbr.rel (0) target = $region29
    $region28: #{tst_encoder_layer.1} parent=1 // pred_region
      %s1650 = ssub.s32 512, 512
      %1651 = vsyncadd [#allocation4], %s1650
      %s1652 = sshll.u32 [#allocation8], 4
      %s1653 = int_to_ptr.vmem [resolvable:$true] %s1652
      %1658 = dma.vmem_to_hbm [thread:$0]  %s1653, 512, %s3, [#allocation4], 128, 128, 8
    $region29: #{tst_encoder_layer.1} parent=1 // pred_fallthru
      _
    // Predicated region
    $region30: #{tst_encoder_layer.1} parent=1 // pred_check
      _
    $region31: #{tst_encoder_layer.1} parent=1 // pred_check_branch
      %1660 = sbr.rel (0) target = $region33
    $region32: #{tst_encoder_layer.1} parent=1 // pred_region
      %1661 = dma.done [#allocation4], 512
    $region33: #{tst_encoder_layer.1} parent=1 // pred_fallthru
      _
    %1662 = vsyncpa [#allocation3], 1
    %1663 = vsyncpa [#allocation6], 1
    %1664 = vsyncpa [#allocation4], 1

</llo_original>
